<compile_context>
chip_gen: v7x
topology: tpu7x:2x2x1
jax: 0.10.0
libtpu: 0.0.40
codegen_flags: <defaults>
</compile_context>

<pallas_src>
import functools

import jax
import jax.numpy as jnp
from jax.experimental import pallas as pl
from jax.experimental.pallas import tpu as pltpu


# ----------------------------------------------------------------------------
# Host-side glue: FPS / KNN / gather (data-dependent indexing, plain JAX)
# ----------------------------------------------------------------------------
def farthest_point_sample(xyz, npoint):
    """xyz: [B, N, 3] -> centroid indices [B, npoint] (deterministic start at 0)."""
    B, N, _ = xyz.shape

    def body(i, state):
        distance, farthest, centroids = state
        centroids = centroids.at[:, i].set(farthest)
        centroid = jnp.take_along_axis(xyz, farthest[:, None, None], axis=1)  # [B,1,3]
        dist = jnp.sum((xyz - centroid) ** 2, axis=-1)                        # [B,N]
        distance = jnp.minimum(distance, dist)
        farthest = jnp.argmax(distance, axis=-1).astype(jnp.int32)
        return distance, farthest, centroids

    distance0 = jnp.full((B, N), 1e10, dtype=xyz.dtype)
    farthest0 = jnp.zeros((B,), dtype=jnp.int32)
    centroids0 = jnp.zeros((B, npoint), dtype=jnp.int32)
    _, _, centroids = jax.lax.fori_loop(0, npoint, body,
                                        (distance0, farthest0, centroids0))
    return centroids


def index_points(points, idx):
    """points [B,N,C], idx [B,S] or [B,S,K] -> gathered [B,S,C] / [B,S,K,C]."""
    if idx.ndim == 2:
        return jnp.take_along_axis(points, idx[..., None], axis=1)
    B, S, K = idx.shape
    flat = idx.reshape(B, S * K)
    out = jnp.take_along_axis(points, flat[..., None], axis=1)
    return out.reshape(B, S, K, points.shape[-1])


def square_distance(src, dst):
    """src [B,N,C], dst [B,M,C] -> squared dist [B,N,M]."""
    dist = -2.0 * jnp.einsum("bnc,bmc->bnm", src, dst)
    dist += jnp.sum(src ** 2, axis=-1)[:, :, None]
    dist += jnp.sum(dst ** 2, axis=-1)[:, None, :]
    return dist


def knn_point(nsample, xyz, new_xyz):
    """Return indices [B,S,nsample] of nsample nearest neighbors of new_xyz in xyz."""
    neg_sqrdists = -square_distance(new_xyz, xyz)
    _, group_idx = jax.lax.top_k(neg_sqrdists, nsample)
    return group_idx


def sample_and_group(npoint, nsample, xyz, points):
    """xyz [B,N,3], points [B,N,D] ->
       new_xyz [B,S,3], new_points [B,S,K,3+D], fps_points [B,S,3+D]."""
    fps_idx = farthest_point_sample(xyz, npoint)                  # [B,S]
    new_xyz = index_points(xyz, fps_idx)                          # [B,S,3]
    idx = knn_point(nsample, xyz, new_xyz)                        # [B,S,K]
    grouped_xyz = index_points(xyz, idx)                          # [B,S,K,3]
    grouped_xyz_norm = grouped_xyz - new_xyz[:, :, None, :]       # [B,S,K,3]
    grouped_points = index_points(points, idx)                    # [B,S,K,D]
    fps_points = jnp.concatenate(
        [new_xyz, index_points(points, fps_idx)], axis=-1)        # [B,S,3+D]
    new_points = jnp.concatenate(
        [grouped_xyz_norm, grouped_points], axis=-1)              # [B,S,K,3+D]
    # TODO(synk): at large N, the KNN gather could be fused into the kernel via
    # PrefetchScalarGridSpec + pl.Element row gather instead of host-side take.
    return new_xyz, new_points, fps_points


def _fold_conv_bn(w, b, gamma, beta, mean, var, eps=1e-5):
    """Fold eval-mode BatchNorm into the 1x1-conv weight/bias:
       bn(conv(x)) == x @ w_f + b_f   (w [C_in,C_out], b/gamma/... [C_out])."""
    scale = gamma / jnp.sqrt(var + eps)
    w_f = w * scale[None, :]
    b_f = b * scale + (beta - mean * scale)
    return w_f, b_f


# ----------------------------------------------------------------------------
# Per-generation knobs (trace-time, best effort with robust fallbacks)
# ----------------------------------------------------------------------------
def _tpu_generation_and_vmem():
    """Return (chip generation int, VMEM bytes per core)."""
    gen = 0
    try:
        kind = jax.devices()[0].device_kind.lower()     # e.g. "tpu v5e", "tpu v6 lite"
        digits = [c for c in kind if c.isdigit()]
        if digits:
            gen = int(digits[0])
    except Exception:
        gen = 0
    if gen <= 0:
        gen = 6
    vmem = None
    try:
        vmem = getattr(pltpu.get_tpu_info(), "vmem_capacity_bytes", None)
    except Exception:
        vmem = None
    if not vmem:
        vmem = (64 if gen >= 7 else 128) * 1024 * 1024
    return gen, vmem


def _choose_s_tile(B, S, K, C0, C1, C2, vmem_budget,
                   compute_bytes, epi_bytes, out_bytes):
    """Largest S-tile that (a) divides S, (b) keeps block dims 8-aligned,
    (c) fits the VMEM budget, (d) still leaves enough grid steps to pipeline."""
    c0p = -(-C0 // 128) * 128           # lane padding of the streamed input
    c1p = -(-C1 // 128) * 128
    c2p = -(-C2 // 128) * 128

    def vmem_use(st):
        rows = st * (K + 1)                                     # neighbor + center rows
        use = rows * c0p * compute_bytes * 2                    # input blocks, double-buffered
        use += st * c2p * out_bytes * 2                         # output block, double-buffered
        use += rows * c2p * 4 * 2                               # h + e_feat (f32 accumulators)
        use += st * K * c2p * epi_bytes * 4                     # e / p / attn / weighted-feat
        use += rows * max(c0p, c2p) * 4                         # relayout / spill slack
        use += (c0p * c1p + c1p * c2p + c2p * c2p) * compute_bytes  # resident weights
        return use

    divs = sorted((d for d in range(1, S + 1)
                   if S % d == 0 and (d == S or d % 8 == 0)), reverse=True)
    fitting = [d for d in divs if vmem_use(d) <= vmem_budget] or [divs[-1]]
    target_steps = min(8, B * (S // fitting[-1]))
    for d in fitting:                                           # largest tile first
        if B * (S // d) >= target_steps:
            return d
    return fitting[-1]


# ----------------------------------------------------------------------------
# Pallas kernel: fused 2-layer (1x1 conv + folded BN + ReLU) MLP + GAT pooling
# for one (batch element, S-tile) block.
# ----------------------------------------------------------------------------
def gac_kernel(grp_ref, ctr_ref, w1_ref, b1_ref, w2_ref, b2_ref,
               neg_a_xyz_ref, a_feat_ref, out_ref, *,
               alpha, xyz_on_mxu, epi_dtype):
    _, GR, C0 = grp_ref.shape            # GR = S_t * K neighbor rows in this tile
    S_t = ctr_ref.shape[1]
    K = GR // S_t
    C2 = w2_ref.shape[1]
    compute_dt = w1_ref.dtype

    vg = grp_ref[...].reshape(GR, C0)    # neighbor rows: [grouped_xyz_norm | feats]
    vc = ctr_ref[...].reshape(S_t, C0)   # center rows:   [new_xyz          | feats]

    # ---- shared 2-layer 1x1-conv MLP (eval BN + bias folded), bf16 MXU, f32 acc ----
    def mlp(x):
        h = jnp.dot(x, w1_ref[...], preferred_element_type=jnp.float32) + b1_ref[...]
        h = jnp.maximum(h, 0.0).astype(compute_dt)
        h = jnp.dot(h, w2_ref[...], preferred_element_type=jnp.float32) + b2_ref[...]
        return jnp.maximum(h, 0.0)       # f32

    hg = mlp(vg)                         # (GR,  C2) grouped (neighbor) features
    hc = mlp(vc)                         # (S_t, C2) center features
    hg_lo = hg.astype(compute_dt)
    hc_lo = hc.astype(compute_dt)

    # ---- attention logits via linearity of the `a` contraction ----
    # e = cat([delta_p, delta_h], -1) @ a
    #   = (center_h @ a[3:]) - (grouped_h @ a[3:]) + delta_p @ a[:3]
    # -> the (S,K,C2) delta_h tensor is never materialized.
    eg = jnp.dot(hg_lo, a_feat_ref[...], preferred_element_type=jnp.float32)
    ec = jnp.dot(hc_lo, a_feat_ref[...], preferred_element_type=jnp.float32)
    eg = eg.astype(epi_dtype).reshape(S_t, K, C2)
    ec = ec.astype(epi_dtype).reshape(S_t, 1, C2)

    # delta_p = center_xyz - grouped_xyz = -(grouped_xyz_norm) = -vg[:, :3];
    # the sign is folded into neg_a_xyz on the host, so vg[:, :3] is used as-is.
    if xyz_on_mxu:
        # v6e / v7x: MXU has slack at production sizes; VPU is the binding slot.
        e_xyz = jnp.dot(vg[:, :3], neg_a_xyz_ref[...].astype(compute_dt),
                        preferred_element_type=jnp.float32)
    else:
        # v5e: no MXU slack -> 3 broadcast multiply-adds on the VPU.
        gxyz = vg[:, :3].astype(jnp.float32)
        ax = neg_a_xyz_ref[...]
        e_xyz = (gxyz[:, 0:1] * ax[0:1, :] + gxyz[:, 1:2] * ax[1:2, :]
                 + gxyz[:, 2:3] * ax[2:3, :])
    e_xyz = e_xyz.astype(epi_dtype).reshape(S_t, K, C2)

    e = (ec - eg) + e_xyz                                    # (S_t, K, C2)
    e = jnp.where(e >= 0, e, alpha * e)                      # LeakyReLU

    # ---- softmax over the K neighbors (dropout = identity in eval mode) ----
    m = jnp.max(e, axis=1, keepdims=True)                    # max is exact in any dtype
    p = jnp.exp(e - m)                                       # bf16 EUP exp on v6e/v7x
    denom = jnp.sum(p.astype(jnp.float32), axis=1, keepdims=True)   # f32 K-sum
    attn = p * pl.reciprocal(denom, approx=True).astype(epi_dtype)

    # ---- graph pooling: sum_k attention * grouped_feature, f32 accumulation ----
    feat = (hg if epi_dtype == jnp.float32 else hg_lo).reshape(S_t, K, C2)
    pooled = jnp.sum((attn * feat.astype(epi_dtype)).astype(jnp.float32), axis=1)
    # TODO(synk): for lane widths C2 < 128 the store is a masked vst; a wrapper-side
    # (S, C2) -> (S*C2) lane-flatten would make it lane-dense but costs an in-kernel
    # relayout that does not pay off at small C2.
    out_ref[...] = pooled.reshape(1, S_t, C2).astype(out_ref.dtype)


# ----------------------------------------------------------------------------
# Wrapper: layout, weight folding, per-generation tiling, pallas_call
# ----------------------------------------------------------------------------
def graph_attention_conv_layer(xyz, points, npoint, nsample, params,
                               alpha=0.2, s_tile=None,
                               compute_dtype=jnp.bfloat16,
                               out_dtype=jnp.float32):
    """Full forward pass. Returns (new_xyz [B,S,3], new_points [B,S,C_last])."""
    new_xyz, new_points, fps_points = sample_and_group(npoint, nsample, xyz, points)
    B, S, K, C0 = new_points.shape

    # Two lane-contiguous operands, each S-tiled by its own BlockSpec:
    #   grp: [B, S*K, C0]  neighbor rows  (first 3 channels = grouped_xyz_norm)
    #   ctr: [B, S,   C0]  center rows    (first 3 channels = new_xyz)
    # Cast to bf16 (halves HBM->VMEM bytes, full-rate bf16 MXU).
    # NOTE: C0 = 3 + D is lane-padded to 128 inside VMEM; keep D such that C0
    # does not land just above a 128 boundary at production sizes.
    grp = new_points.reshape(B, S * K, C0).astype(compute_dtype)
    ctr = fps_points.astype(compute_dtype)

    # Fold eval-mode BN + conv bias into the weights on the host.
    (w1, b1, g1, be1, m1, v1), (w2, b2, g2, be2, m2, v2) = params["mlp"]
    w1f, b1f = _fold_conv_bn(w1, b1, g1, be1, m1, v1)
    w2f, b2f = _fold_conv_bn(w2, b2, g2, be2, m2, v2)
    w1f = w1f.astype(compute_dtype)
    w2f = w2f.astype(compute_dtype)
    b1f = b1f.reshape(1, -1).astype(jnp.float32)
    b2f = b2f.reshape(1, -1).astype(jnp.float32)
    a = params["a"]
    neg_a_xyz = (-a[:3]).astype(jnp.float32)   # sign of delta_p folded in here
    a_feat = a[3:].astype(compute_dtype)
    C1, C2 = w1f.shape[1], w2f.shape[1]

    # Per-generation choices: epilogue dtype, xyz-term placement, VMEM budget.
    gen, vmem_cap = _tpu_generation_and_vmem()
    xyz_on_mxu = gen >= 6                      # keep on VPU on v5e (no MXU slack)
    epi_dtype = jnp.bfloat16 if gen >= 6 else jnp.float32   # bf16 VPU/EUP only on v6e+
    vmem_limit = max(32 * 2 ** 20, min(int(vmem_cap * 0.85), 100 * 2 ** 20))

    if s_tile is None:
        s_tile = _choose_s_tile(
            B, S, K, C0, C1, C2,
            vmem_budget=int(vmem_limit * 0.7),
            compute_bytes=jnp.dtype(compute_dtype).itemsize,
            epi_bytes=jnp.dtype(epi_dtype).itemsize,
            out_bytes=jnp.dtype(out_dtype).itemsize)
    assert S % s_tile == 0 and (s_tile == S or s_tile % 8 == 0)
    grid = (B, S // s_tile)

    kernel = functools.partial(gac_kernel, alpha=alpha,
                               xyz_on_mxu=xyz_on_mxu, epi_dtype=epi_dtype)
    out = pl.pallas_call(
        kernel,
        out_shape=jax.ShapeDtypeStruct((B, S, C2), out_dtype),
        grid=grid,
        in_specs=[
            pl.BlockSpec((1, s_tile * K, C0), lambda b, s: (b, s, 0)),   # neighbors
            pl.BlockSpec((1, s_tile, C0), lambda b, s: (b, s, 0)),       # centers
            pl.BlockSpec((C0, C1), lambda b, s: (0, 0)),                 # w1 (folded)
            pl.BlockSpec((1, C1), lambda b, s: (0, 0)),                  # b1 (folded)
            pl.BlockSpec((C1, C2), lambda b, s: (0, 0)),                 # w2 (folded)
            pl.BlockSpec((1, C2), lambda b, s: (0, 0)),                  # b2 (folded)
            pl.BlockSpec((3, C2), lambda b, s: (0, 0)),                  # -a[:3]
            pl.BlockSpec((C2, C2), lambda b, s: (0, 0)),                 # a[3:]
        ],
        out_specs=pl.BlockSpec((1, s_tile, C2), lambda b, s: (b, s, 0)),
        compiler_params=pltpu.CompilerParams(
            dimension_semantics=("parallel", "parallel"),
            vmem_limit_bytes=vmem_limit),
    )(grp, ctr, w1f, b1f, w2f, b2f, neg_a_xyz, a_feat)

    return new_xyz, out


# ----------------------------------------------------------------------------
# Deterministic parameter init (mirrors Conv2d / BatchNorm2d / GAT `a` shapes)
# ----------------------------------------------------------------------------
def init_params(key, in_channel, mlp):
    layers = []
    last = in_channel
    keys = jax.random.split(key, 2 * len(mlp) + 1)
    for i, out_c in enumerate(mlp):
        kw, kb = keys[2 * i], keys[2 * i + 1]
        bound = 1.0 / float(last) ** 0.5
        # Conv2d(last, out_c, 1) weight [out_c, last, 1, 1] stored transposed [last, out_c]
        w = jax.random.uniform(kw, (last, out_c), jnp.float32, -bound, bound)
        b = jax.random.uniform(kb, (out_c,), jnp.float32, -bound, bound)
        # BatchNorm2d(out_c) eval-mode statistics
        gamma = jnp.ones((out_c,), jnp.float32)
        beta = jnp.zeros((out_c,), jnp.float32)
        mean = jnp.zeros((out_c,), jnp.float32)
        var = jnp.ones((out_c,), jnp.float32)
        layers.append((w, b, gamma, beta, mean, var))
        last = out_c
    # GAT: a is (3 + last, last), xavier_uniform with gain=1.414
    all_channel, feat_dim = 3 + last, last
    gain = 1.414
    bound = gain * (6.0 / (all_channel + feat_dim)) ** 0.5
    a = jax.random.uniform(keys[-1], (all_channel, feat_dim), jnp.float32,
                           -bound, bound)
    return {"mlp": layers, "a": a}


if __name__ == "__main__":
    key = jax.random.PRNGKey(0)
    B, N, D = 2, 64, 6          # batch, num points, point feature dim
    npoint, nsample = 16, 8     # S (sampled centers), K (neighbors)
    in_channel = 3 + D          # conv input channels = xyz(3) + features(D)
    mlp = [16, 32]

    k_xyz, k_pts, k_par = jax.random.split(key, 3)
    xyz = jax.random.normal(k_xyz, (B, N, 3), dtype=jnp.float32)
    points = jax.random.normal(k_pts, (B, N, D), dtype=jnp.float32)
    params = init_params(k_par, in_channel, mlp)

    fwd = jax.jit(graph_attention_conv_layer,
                  static_argnames=("npoint", "nsample", "alpha", "s_tile"))
    new_xyz, new_feat = fwd(xyz, points, npoint=npoint, nsample=nsample,
                            params=params)
    jax.block_until_ready((new_xyz, new_feat))
    assert new_xyz.shape == (B, npoint, 3)
    assert new_feat.shape == (B, npoint, mlp[-1])
    assert bool(jnp.all(jnp.isfinite(new_feat)))
    print("KERNEL_OK")
</pallas_src>

<mosaic_0001>
module attributes {stable_mosaic.version = 11 : i64} {
  func.func @gac_kernel(%arg0: i32, %arg1: i32, %arg2: memref<1x64x9xbf16, #tpu.memory_space<vmem>>, %arg3: memref<1x8x9xbf16, #tpu.memory_space<vmem>>, %arg4: memref<9x16xbf16, #tpu.memory_space<vmem>>, %arg5: memref<1x16xf32, #tpu.memory_space<vmem>>, %arg6: memref<16x32xbf16, #tpu.memory_space<vmem>>, %arg7: memref<1x32xf32, #tpu.memory_space<vmem>>, %arg8: memref<3x32xf32, #tpu.memory_space<vmem>>, %arg9: memref<32x32xbf16, #tpu.memory_space<vmem>>, %arg10: memref<1x8x32xf32, #tpu.memory_space<vmem>>) attributes {dimension_semantics = [#tpu.dimension_semantics<parallel>, #tpu.dimension_semantics<parallel>], iteration_bounds = array<i64: 2, 2>, scalar_prefetch = 0 : i64, scratch_operands = 0 : i64, tpu.core_type = #tpu.core_type<tc>, window_params = [{transform_indices = @transform_0, window_bounds = array<i64: 1, 64, 9>}, {transform_indices = @transform_1, window_bounds = array<i64: 1, 8, 9>}, {pipeline_mode = #tpu.pipeline_mode<synchronous>, transform_indices = @transform_2, window_bounds = array<i64: 9, 16>}, {pipeline_mode = #tpu.pipeline_mode<synchronous>, transform_indices = @transform_3, window_bounds = array<i64: 1, 16>}, {pipeline_mode = #tpu.pipeline_mode<synchronous>, transform_indices = @transform_4, window_bounds = array<i64: 16, 32>}, {pipeline_mode = #tpu.pipeline_mode<synchronous>, transform_indices = @transform_5, window_bounds = array<i64: 1, 32>}, {pipeline_mode = #tpu.pipeline_mode<synchronous>, transform_indices = @transform_6, window_bounds = array<i64: 3, 32>}, {pipeline_mode = #tpu.pipeline_mode<synchronous>, transform_indices = @transform_7, window_bounds = array<i64: 32, 32>}, {transform_indices = @transform_8, window_bounds = array<i64: 1, 8, 32>}]} {
    %c0 = arith.constant 0 : index
    %c0_0 = arith.constant 0 : index
    %c0_1 = arith.constant 0 : index
    %0 = vector.load %arg2[%c0, %c0_0, %c0_1] : memref<1x64x9xbf16, #tpu.memory_space<vmem>>, vector<1x64x9xbf16>
    %1 = vector.shape_cast %0 : vector<1x64x9xbf16> to vector<64x9xbf16>
    %c0_2 = arith.constant 0 : index
    %c0_3 = arith.constant 0 : index
    %c0_4 = arith.constant 0 : index
    %2 = vector.load %arg3[%c0_2, %c0_3, %c0_4] : memref<1x8x9xbf16, #tpu.memory_space<vmem>>, vector<1x8x9xbf16>
    %3 = vector.shape_cast %2 : vector<1x8x9xbf16> to vector<8x9xbf16>
    %c0_5 = arith.constant 0 : index
    %c0_6 = arith.constant 0 : index
    %4 = vector.load %arg4[%c0_5, %c0_6] : memref<9x16xbf16, #tpu.memory_space<vmem>>, vector<9x16xbf16>
    %cst = arith.constant dense<0.000000e+00> : vector<64x16xf32>
    %5 = tpu.matmul %1, %4, %cst {dimension_numbers = #tpu.dot_dimension_numbers<[1], [0], [0], [1], [0, 0, 1, 1], [], []>} : vector<64x9xbf16>, vector<9x16xbf16>, vector<64x16xf32> -> vector<64x16xf32>
    %c0_7 = arith.constant 0 : index
    %c0_8 = arith.constant 0 : index
    %6 = vector.load %arg5[%c0_7, %c0_8] : memref<1x16xf32, #tpu.memory_space<vmem>>, vector<1x16xf32>
    %7 = vector.broadcast %6 : vector<1x16xf32> to vector<64x16xf32>
    %8 = arith.addf %5, %7 : vector<64x16xf32>
    %cst_9 = arith.constant 0.000000e+00 : f32
    %9 = vector.broadcast %cst_9 : f32 to vector<64x16xf32>
    %10 = arith.maximumf %8, %9 : vector<64x16xf32>
    %11 = arith.truncf %10 : vector<64x16xf32> to vector<64x16xbf16>
    %c0_10 = arith.constant 0 : index
    %c0_11 = arith.constant 0 : index
    %12 = vector.load %arg6[%c0_10, %c0_11] : memref<16x32xbf16, #tpu.memory_space<vmem>>, vector<16x32xbf16>
    %cst_12 = arith.constant dense<0.000000e+00> : vector<64x32xf32>
    %13 = tpu.matmul %11, %12, %cst_12 {dimension_numbers = #tpu.dot_dimension_numbers<[1], [0], [0], [1], [0, 0, 1, 1], [], []>} : vector<64x16xbf16>, vector<16x32xbf16>, vector<64x32xf32> -> vector<64x32xf32>
    %c0_13 = arith.constant 0 : index
    %c0_14 = arith.constant 0 : index
    %14 = vector.load %arg7[%c0_13, %c0_14] : memref<1x32xf32, #tpu.memory_space<vmem>>, vector<1x32xf32>
    %15 = vector.broadcast %14 : vector<1x32xf32> to vector<64x32xf32>
    %16 = arith.addf %13, %15 : vector<64x32xf32>
    %cst_15 = arith.constant 0.000000e+00 : f32
    %17 = vector.broadcast %cst_15 : f32 to vector<64x32xf32>
    %18 = arith.maximumf %16, %17 : vector<64x32xf32>
    %c0_16 = arith.constant 0 : index
    %c0_17 = arith.constant 0 : index
    %19 = vector.load %arg4[%c0_16, %c0_17] : memref<9x16xbf16, #tpu.memory_space<vmem>>, vector<9x16xbf16>
    %cst_18 = arith.constant dense<0.000000e+00> : vector<8x16xf32>
    %20 = tpu.matmul %3, %19, %cst_18 {dimension_numbers = #tpu.dot_dimension_numbers<[1], [0], [0], [1], [0, 0, 1, 1], [], []>} : vector<8x9xbf16>, vector<9x16xbf16>, vector<8x16xf32> -> vector<8x16xf32>
    %c0_19 = arith.constant 0 : index
    %c0_20 = arith.constant 0 : index
    %21 = vector.load %arg5[%c0_19, %c0_20] : memref<1x16xf32, #tpu.memory_space<vmem>>, vector<1x16xf32>
    %22 = vector.broadcast %21 : vector<1x16xf32> to vector<8x16xf32>
    %23 = arith.addf %20, %22 : vector<8x16xf32>
    %cst_21 = arith.constant 0.000000e+00 : f32
    %24 = vector.broadcast %cst_21 : f32 to vector<8x16xf32>
    %25 = arith.maximumf %23, %24 : vector<8x16xf32>
    %26 = arith.truncf %25 : vector<8x16xf32> to vector<8x16xbf16>
    %c0_22 = arith.constant 0 : index
    %c0_23 = arith.constant 0 : index
    %27 = vector.load %arg6[%c0_22, %c0_23] : memref<16x32xbf16, #tpu.memory_space<vmem>>, vector<16x32xbf16>
    %cst_24 = arith.constant dense<0.000000e+00> : vector<8x32xf32>
    %28 = tpu.matmul %26, %27, %cst_24 {dimension_numbers = #tpu.dot_dimension_numbers<[1], [0], [0], [1], [0, 0, 1, 1], [], []>} : vector<8x16xbf16>, vector<16x32xbf16>, vector<8x32xf32> -> vector<8x32xf32>
    %c0_25 = arith.constant 0 : index
    %c0_26 = arith.constant 0 : index
    %29 = vector.load %arg7[%c0_25, %c0_26] : memref<1x32xf32, #tpu.memory_space<vmem>>, vector<1x32xf32>
    %30 = vector.broadcast %29 : vector<1x32xf32> to vector<8x32xf32>
    %31 = arith.addf %28, %30 : vector<8x32xf32>
    %cst_27 = arith.constant 0.000000e+00 : f32
    %32 = vector.broadcast %cst_27 : f32 to vector<8x32xf32>
    %33 = arith.maximumf %31, %32 : vector<8x32xf32>
    %34 = arith.truncf %18 : vector<64x32xf32> to vector<64x32xbf16>
    %35 = arith.truncf %33 : vector<8x32xf32> to vector<8x32xbf16>
    %c0_28 = arith.constant 0 : index
    %c0_29 = arith.constant 0 : index
    %36 = vector.load %arg9[%c0_28, %c0_29] : memref<32x32xbf16, #tpu.memory_space<vmem>>, vector<32x32xbf16>
    %cst_30 = arith.constant dense<0.000000e+00> : vector<64x32xf32>
    %37 = tpu.matmul %34, %36, %cst_30 {dimension_numbers = #tpu.dot_dimension_numbers<[1], [0], [0], [1], [0, 0, 1, 1], [], []>} : vector<64x32xbf16>, vector<32x32xbf16>, vector<64x32xf32> -> vector<64x32xf32>
    %c0_31 = arith.constant 0 : index
    %c0_32 = arith.constant 0 : index
    %38 = vector.load %arg9[%c0_31, %c0_32] : memref<32x32xbf16, #tpu.memory_space<vmem>>, vector<32x32xbf16>
    %cst_33 = arith.constant dense<0.000000e+00> : vector<8x32xf32>
    %39 = tpu.matmul %35, %38, %cst_33 {dimension_numbers = #tpu.dot_dimension_numbers<[1], [0], [0], [1], [0, 0, 1, 1], [], []>} : vector<8x32xbf16>, vector<32x32xbf16>, vector<8x32xf32> -> vector<8x32xf32>
    %40 = arith.truncf %37 : vector<64x32xf32> to vector<64x32xbf16>
    %41 = vector.shape_cast %40 : vector<64x32xbf16> to vector<8x8x32xbf16>
    %42 = arith.truncf %39 : vector<8x32xf32> to vector<8x32xbf16>
    %43 = vector.shape_cast %42 : vector<8x32xbf16> to vector<8x1x32xbf16>
    %44 = vector.extract_strided_slice %1 {offsets = [0, 0], sizes = [64, 3], strides = [1, 1]} : vector<64x9xbf16> to vector<64x3xbf16>
    %c0_34 = arith.constant 0 : index
    %c0_35 = arith.constant 0 : index
    %45 = vector.load %arg8[%c0_34, %c0_35] : memref<3x32xf32, #tpu.memory_space<vmem>>, vector<3x32xf32>
    %46 = arith.truncf %45 : vector<3x32xf32> to vector<3x32xbf16>
    %cst_36 = arith.constant dense<0.000000e+00> : vector<64x32xf32>
    %47 = tpu.matmul %44, %46, %cst_36 {dimension_numbers = #tpu.dot_dimension_numbers<[1], [0], [0], [1], [0, 0, 1, 1], [], []>} : vector<64x3xbf16>, vector<3x32xbf16>, vector<64x32xf32> -> vector<64x32xf32>
    %48 = arith.truncf %47 : vector<64x32xf32> to vector<64x32xbf16>
    %49 = vector.shape_cast %48 : vector<64x32xbf16> to vector<8x8x32xbf16>
    %50 = vector.broadcast %43 : vector<8x1x32xbf16> to vector<8x8x32xbf16>
    %51 = arith.subf %50, %41 : vector<8x8x32xbf16>
    %52 = arith.addf %51, %49 : vector<8x8x32xbf16>
    %cst_37 = arith.constant 0.000000e+00 : bf16
    %53 = vector.broadcast %cst_37 : bf16 to vector<8x8x32xbf16>
    %54 = arith.cmpf oge, %52, %53 : vector<8x8x32xbf16>
    %cst_38 = arith.constant 2.001950e-01 : bf16
    %55 = vector.broadcast %cst_38 : bf16 to vector<8x8x32xbf16>
    %56 = arith.mulf %55, %52 : vector<8x8x32xbf16>
    %57 = arith.select %54, %52, %56 : vector<8x8x32xi1>, vector<8x8x32xbf16>
    %cst_39 = arith.constant dense<0xFF80> : vector<8x32xbf16>
    %58 = vector.multi_reduction <maximumf>, %57, %cst_39 [1] : vector<8x8x32xbf16> to vector<8x32xbf16>
    %59 = vector.shape_cast %58 : vector<8x32xbf16> to vector<8x1x32xbf16>
    %60 = vector.broadcast %59 : vector<8x1x32xbf16> to vector<8x8x32xbf16>
    %61 = arith.subf %57, %60 : vector<8x8x32xbf16>
    %62 = math.exp %61 : vector<8x8x32xbf16>
    %63 = arith.extf %62 : vector<8x8x32xbf16> to vector<8x8x32xf32>
    %cst_40 = arith.constant dense<0.000000e+00> : vector<8x32xf32>
    %64 = vector.multi_reduction <add>, %63, %cst_40 [1] : vector<8x8x32xf32> to vector<8x32xf32>
    %65 = vector.shape_cast %64 : vector<8x32xf32> to vector<8x1x32xf32>
    %66 = tpu.reciprocal %65 {approx = true} : vector<8x1x32xf32> -> vector<8x1x32xf32>
    %67 = arith.truncf %66 : vector<8x1x32xf32> to vector<8x1x32xbf16>
    %68 = vector.broadcast %67 : vector<8x1x32xbf16> to vector<8x8x32xbf16>
    %69 = arith.mulf %62, %68 : vector<8x8x32xbf16>
    %70 = vector.shape_cast %34 : vector<64x32xbf16> to vector<8x8x32xbf16>
    %71 = arith.mulf %69, %70 : vector<8x8x32xbf16>
    %72 = arith.extf %71 : vector<8x8x32xbf16> to vector<8x8x32xf32>
    %cst_41 = arith.constant dense<0.000000e+00> : vector<8x32xf32>
    %73 = vector.multi_reduction <add>, %72, %cst_41 [1] : vector<8x8x32xf32> to vector<8x32xf32>
    %74 = vector.shape_cast %73 : vector<8x32xf32> to vector<1x8x32xf32>
    %c0_42 = arith.constant 0 : index
    %c0_43 = arith.constant 0 : index
    %c0_44 = arith.constant 0 : index
    %75 = vector.load %arg10[%c0_42, %c0_43, %c0_44] : memref<1x8x32xf32, #tpu.memory_space<vmem>>, vector<1x8x32xf32>
    tpu.vector_store %arg10[%c0_42, %c0_43, %c0_44], %74 {strides = array<i32>} : memref<1x8x32xf32, #tpu.memory_space<vmem>>, vector<1x8x32xf32>,
    return
  }
  func.func @transform_0(%arg0: i32, %arg1: i32) -> (i32, i32, i32) {
    %c0_i32 = arith.constant 0 : i32
    %c0_i32_0 = arith.constant 0 : i32
    return %arg0, %arg1, %c0_i32 : i32, i32, i32
  }
  func.func @transform_1(%arg0: i32, %arg1: i32) -> (i32, i32, i32) {
    %c0_i32 = arith.constant 0 : i32
    %c0_i32_0 = arith.constant 0 : i32
    return %arg0, %arg1, %c0_i32 : i32, i32, i32
  }
  func.func @transform_2(%arg0: i32, %arg1: i32) -> (i32, i32) {
    %c0_i32 = arith.constant 0 : i32
    %c0_i32_0 = arith.constant 0 : i32
    %c0_i32_1 = arith.constant 0 : i32
    return %c0_i32, %c0_i32_0 : i32, i32
  }
  func.func @transform_3(%arg0: i32, %arg1: i32) -> (i32, i32) {
    %c0_i32 = arith.constant 0 : i32
    %c0_i32_0 = arith.constant 0 : i32
    %c0_i32_1 = arith.constant 0 : i32
    return %c0_i32, %c0_i32_0 : i32, i32
  }
  func.func @transform_4(%arg0: i32, %arg1: i32) -> (i32, i32) {
    %c0_i32 = arith.constant 0 : i32
    %c0_i32_0 = arith.constant 0 : i32
    %c0_i32_1 = arith.constant 0 : i32
    return %c0_i32, %c0_i32_0 : i32, i32
  }
  func.func @transform_5(%arg0: i32, %arg1: i32) -> (i32, i32) {
    %c0_i32 = arith.constant 0 : i32
    %c0_i32_0 = arith.constant 0 : i32
    %c0_i32_1 = arith.constant 0 : i32
    return %c0_i32, %c0_i32_0 : i32, i32
  }
  func.func @transform_6(%arg0: i32, %arg1: i32) -> (i32, i32) {
    %c0_i32 = arith.constant 0 : i32
    %c0_i32_0 = arith.constant 0 : i32
    %c0_i32_1 = arith.constant 0 : i32
    return %c0_i32, %c0_i32_0 : i32, i32
  }
  func.func @transform_7(%arg0: i32, %arg1: i32) -> (i32, i32) {
    %c0_i32 = arith.constant 0 : i32
    %c0_i32_0 = arith.constant 0 : i32
    %c0_i32_1 = arith.constant 0 : i32
    return %c0_i32, %c0_i32_0 : i32, i32
  }
  func.func @transform_8(%arg0: i32, %arg1: i32) -> (i32, i32, i32) {
    %c0_i32 = arith.constant 0 : i32
    %c0_i32_0 = arith.constant 0 : i32
    return %arg0, %arg1, %c0_i32 : i32, i32, i32
  }
}

</mosaic_0001>

<llo_original>
// kernel: custom-call.10
$region0: #{custom-call.10}
  %s0 = inlined_call_operand.vmem [shape: f32[2,64], index: 0, kind: output, shape index: {}]

// kernel: neg.3
$region0: #{neg.3}
  #allocation2 [shape = 's32[1]{0}', space=sflag, size = 0x4, scoped, tag = 'scoped memory for neg.3']
  %s0 = inlined_call_operand.vmem [shape: f32[3,32], index: 0, kind: input, shape index: {}]
  %s1 = inlined_call_operand.hbm [shape: f32[3,32], index: 1, kind: output, shape index: {}]
  $region1: #{neg.3} parent=0
    #allocation0 [shape = 'u8[2048]{0}', space=vmem, size = 0x800, scoped, tag = 'operand span for operand 1']
    #allocation1 [shape = 's32[1]{0}', space=sflag, size = 0x4, scoped, tag = 'scoped memory for neg.3']
    %2 = vsyncpa [#allocation1], 0
    %v3 = vld [vmem:[%s0] sm:$0x7]
    %4 = xla_tuple %v3
    %5 = xla_tuple %4
    %v6 = vxor.u32 %v3, 2147483648
    %7 = xla_tuple %v6
    %8 = vst [vmem:[#allocation0] sm:$0xf] %v6
    %s10 = ssub.s32 64, 64
    %11 = vsyncadd [#allocation1], %s10
    %s13 = sshll.u32 [#allocation0], 4
    %s14 = int_to_ptr.vmem [resolvable:$true] %s13
    %16 = dma.vmem_to_hbm [thread:$0]  %s14, 64, %s1, [#allocation1]
    %17 = dma.done [#allocation1], 64
    %18 = vsyncpa [#allocation1], 1

// kernel: graph_attention_conv_layer.1
$region0: #{graph_attention_conv_layer.1}
  #allocation0 [shape = 'u32[]', space=smem, size = 0x4, offset = 0x4, fixed_abs, tag = 'smem constant byte address 0x4 - core index']
  #allocation1 [shape = 'u32[144,128]{1,0:T(1,128)}', space=vmem, size = 0x12000, scoped, tag = 'internal scratch']
  %s0 = inlined_call_operand.hbm [shape: bf16[2,128,9], index: 0, kind: input, shape index: {}]
  %s1 = inlined_call_operand.hbm [shape: bf16[2,16,9], index: 1, kind: input, shape index: {}]
  %s2 = inlined_call_operand.hbm [shape: bf16[9,16], index: 2, kind: input, shape index: {}]
  %s3 = inlined_call_operand.hbm [shape: f32[1,16], index: 3, kind: input, shape index: {}]
  %s4 = inlined_call_operand.hbm [shape: bf16[16,32], index: 4, kind: input, shape index: {}]
  %s5 = inlined_call_operand.hbm [shape: f32[1,32], index: 5, kind: input, shape index: {}]
  %s6 = inlined_call_operand.hbm [shape: f32[3,32], index: 6, kind: input, shape index: {}]
  %s7 = inlined_call_operand.hbm [shape: bf16[32,32], index: 7, kind: input, shape index: {}]
  %s8 = inlined_call_operand.hbm [shape: f32[2,16,32], index: 8, kind: output, shape index: {}]
  %s9 = sld [smem:[#allocation0]]
  $region97: #{graph_attention_conv_layer.1} parent=0
    _
  %s11 = ssub.s32 1, %s9
  %s12 = scalar_select 0, %s11, %s9
  $region1: #{graph_attention_conv_layer.1} parent=0
    #allocation2 [shape = 'u8[32768]{0}', space=vmem, size = 0x8000, scoped, tag = 'input window, operand 0']
    #allocation3 [shape = 's32[2]{0}', space=sflag, size = 0x8, scoped, tag = 'scoped memory for graph_attention_conv_layer.1']
    #allocation4 [shape = 's32[2]{0}', space=sflag, size = 0x8, scoped, tag = 'scoped memory for graph_attention_conv_layer.1']
    #allocation5 [shape = 'u8[4096]{0}', space=vmem, size = 0x1000, scoped, tag = 'input window, operand 1']
    #allocation6 [shape = 's32[2]{0}', space=sflag, size = 0x8, scoped, tag = 'scoped memory for graph_attention_conv_layer.1']
    #allocation7 [shape = 'u8[4096]{0}', space=vmem, size = 0x1000, scoped, tag = 'input window, operand 2, single buffered']
    #allocation8 [shape = 'u8[512]{0}', space=vmem, size = 0x400, scoped, tag = 'input window, operand 3, single buffered']
    #allocation9 [shape = 's32[1]{0}', space=sflag, size = 0x4, scoped, tag = 'scoped memory for graph_attention_conv_layer.1']
    #allocation10 [shape = 'u8[4096]{0}', space=vmem, size = 0x1000, scoped, tag = 'input window, operand 4, single buffered']
    #allocation11 [shape = 'u8[512]{0}', space=vmem, size = 0x400, scoped, tag = 'input window, operand 5, single buffered']
    #allocation12 [shape = 's32[1]{0}', space=sflag, size = 0x4, scoped, tag = 'scoped memory for graph_attention_conv_layer.1']
    #allocation13 [shape = 'u8[2048]{0}', space=vmem, size = 0x800, scoped, tag = 'input window, operand 6, single buffered']
    #allocation14 [shape = 'u8[8192]{0}', space=vmem, size = 0x2000, scoped, tag = 'input window, operand 7, single buffered']
    #allocation15 [shape = 's32[1]{0}', space=sflag, size = 0x4, scoped, tag = 'scoped memory for graph_attention_conv_layer.1']
    #allocation16 [shape = 'u8[8192]{0}', space=vmem, size = 0x2000, scoped, tag = 'output window, operand 0']
    %13 = vsyncpa [#allocation3], 0
    %s14 = scalar_lea.sflag [#allocation3], 1
    %15 = vsyncpa %s14, 0
    %16 = vsyncpa [#allocation6], 0
    %s17 = scalar_lea.sflag [#allocation6], 1
    %18 = vsyncpa %s17, 0
    %19 = vsyncpa [#allocation9], 0
    %20 = vsyncpa [#allocation12], 0
    %21 = vsyncpa [#allocation15], 0
    %22 = vsyncpa [#allocation4], 0
    %s23 = scalar_lea.sflag [#allocation4], 1
    %24 = vsyncpa %s23, 0
    loop: start=0, step=1, limit=6
    $region2: #{graph_attention_conv_layer.1} parent=1 // loop_pre_header
      _
    $region3: #{graph_attention_conv_layer.1} parent=1 // loop_header
      %s26 = sphi 0, %s30
      %p27 = scmp.ge.s32.totalorder %s26, 6
      %s33 = sphi 0, %s45
      %s34 = sphi 0, %s41
      %s35 = sphi 0, %s33
      %s36 = sphi 0, %s34
      %s37 = sphi 0, %s35
      %s38 = sphi 0, %s36
      %s50 = sphi 0, %s52
      %s53 = sphi 0, %s50
      %s54 = sphi 0, %s53
      %s70 = sphi 0, %s54
      %s78 = sphi 0, %s80
      %s81 = sphi 0, %s78
      %s82 = sphi 0, %s81
      %s98 = sphi 0, %s82
      %s102 = sphi 0, %s102
      %s104 = sphi 0, %s102
      %s105 = sphi 0, %s104
      %s119 = sphi 0, %s105
      %s123 = sphi 0, %s123
      %s125 = sphi 0, %s123
      %s126 = sphi 0, %s125
      %s140 = sphi 0, %s126
      %s144 = sphi 0, %s144
      %s146 = sphi 0, %s144
      %s147 = sphi 0, %s146
      %s161 = sphi 0, %s147
      %s165 = sphi 0, %s165
      %s167 = sphi 0, %s165
      %s168 = sphi 0, %s167
      %s182 = sphi 0, %s168
      %s186 = sphi 0, %s186
      %s188 = sphi 0, %s186
      %s189 = sphi 0, %s188
      %s203 = sphi 0, %s189
      %s207 = sphi 0, %s207
      %s209 = sphi 0, %s207
      %s210 = sphi 0, %s209
      %s224 = sphi 0, %s210
      %s232 = sphi 0, %s234
      %s235 = sphi 0, %s232
      %s236 = sphi 0, %s235
      %s252 = sphi 0, %s236
    $region4: #{graph_attention_conv_layer.1} parent=1 // loop_header_branch
      %29 = sbr.rel (%p27) target = $region8
    $region5: #{graph_attention_conv_layer.1} parent=1 // loop_body
      %s31 = ssub.s32 %s26, 1
      %s32 = ssub.s32 %s26, 2
      %s39 = sadd.s32 1, %s34
      %p40 = scmp.ge.s32.totalorder %s39, 2
      %s41 = scalar_select %p40, 0, %s39
      %s42 = sadd.s32 1, %s33
      %s43 = scalar_select %p40, %s42, %s33
      %p44 = scmp.ge.s32.totalorder %s43, 2
      %s45 = scalar_select %p44, 0, %s43
      %s46 = ssub.s32 %s33, %s45
      %s47 = ssub.s32 %s34, %s41
      %s48 = sor.u32 %s46, %s47
      %p49 = scmp.eq.s32.totalorder %s48, 0
      %s51 = sadd.s32 %s50, 1
      %s52 = scalar_select %p49, %s50, %s51
      %p55 = pneg %p49
      %p56 = scmp.eq.s32.totalorder %s26, 3
      %p57 = por %p55, %p56
      %p58 = scmp.ne.s32.totalorder %s50, %s53
      %p59 = scmp.eq.s32.totalorder %s26, 0
      %p60 = por %p58, %p59
      %p61 = scmp.ne.s32.totalorder %s50, %s53
      %p62 = scmp.eq.s32.totalorder %s31, 3
      %p63 = por %p61, %p62
      %p64 = scmp.ne.s32.totalorder %s53, %s54
      %p65 = scmp.eq.s32.totalorder %s31, 0
      %p66 = por %p64, %p65
      %p67 = scmp.ne.s32.totalorder %s53, %s54
      %p68 = scmp.eq.s32.totalorder %s32, 3
      %p69 = por %p67, %p68
      %p71 = scmp.ne.s32.totalorder %s54, %s70
      %p72 = scmp.eq.s32.totalorder %s32, 0
      %p73 = por %p71, %p72
      %s74 = ssub.s32 %s33, %s45
      %s75 = ssub.s32 %s34, %s41
      %s76 = sor.u32 %s74, %s75
      %p77 = scmp.eq.s32.totalorder %s76, 0
      %s79 = sadd.s32 %s78, 1
      %s80 = scalar_select %p77, %s78, %s79
      %p83 = pneg %p77
      %p84 = scmp.eq.s32.totalorder %s26, 3
      %p85 = por %p83, %p84
      %p86 = scmp.ne.s32.totalorder %s78, %s81
      %p87 = scmp.eq.s32.totalorder %s26, 0
      %p88 = por %p86, %p87
      %p89 = scmp.ne.s32.totalorder %s78, %s81
      %p90 = scmp.eq.s32.totalorder %s31, 3
      %p91 = por %p89, %p90
      %p92 = scmp.ne.s32.totalorder %s81, %s82
      %p93 = scmp.eq.s32.totalorder %s31, 0
      %p94 = por %p92, %p93
      %p95 = scmp.ne.s32.totalorder %s81, %s82
      %p96 = scmp.eq.s32.totalorder %s32, 3
      %p97 = por %p95, %p96
      %p99 = scmp.ne.s32.totalorder %s82, %s98
      %p100 = scmp.eq.s32.totalorder %s32, 0
      %p101 = por %p99, %p100
      %s103 = sadd.s32 %s102, 1
      %p106 = scmp.eq.s32.totalorder %s26, 3
      %p107 = scmp.ne.s32.totalorder %s102, %s104
      %p108 = scmp.eq.s32.totalorder %s26, 0
      %p109 = por %p107, %p108
      %p110 = scmp.ne.s32.totalorder %s102, %s104
      %p111 = scmp.eq.s32.totalorder %s31, 3
      %p112 = por %p110, %p111
      %p113 = scmp.ne.s32.totalorder %s104, %s105
      %p114 = scmp.eq.s32.totalorder %s31, 0
      %p115 = por %p113, %p114
      %p116 = scmp.ne.s32.totalorder %s104, %s105
      %p117 = scmp.eq.s32.totalorder %s32, 3
      %p118 = por %p116, %p117
      %p120 = scmp.ne.s32.totalorder %s105, %s119
      %p121 = scmp.eq.s32.totalorder %s32, 0
      %p122 = por %p120, %p121
      %s124 = sadd.s32 %s123, 1
      %p127 = scmp.eq.s32.totalorder %s26, 3
      %p128 = scmp.ne.s32.totalorder %s123, %s125
      %p129 = scmp.eq.s32.totalorder %s26, 0
      %p130 = por %p128, %p129
      %p131 = scmp.ne.s32.totalorder %s123, %s125
      %p132 = scmp.eq.s32.totalorder %s31, 3
      %p133 = por %p131, %p132
      %p134 = scmp.ne.s32.totalorder %s125, %s126
      %p135 = scmp.eq.s32.totalorder %s31, 0
      %p136 = por %p134, %p135
      %p137 = scmp.ne.s32.totalorder %s125, %s126
      %p138 = scmp.eq.s32.totalorder %s32, 3
      %p139 = por %p137, %p138
      %p141 = scmp.ne.s32.totalorder %s126, %s140
      %p142 = scmp.eq.s32.totalorder %s32, 0
      %p143 = por %p141, %p142
      %s145 = sadd.s32 %s144, 1
      %p148 = scmp.eq.s32.totalorder %s26, 3
      %p149 = scmp.ne.s32.totalorder %s144, %s146
      %p150 = scmp.eq.s32.totalorder %s26, 0
      %p151 = por %p149, %p150
      %p152 = scmp.ne.s32.totalorder %s144, %s146
      %p153 = scmp.eq.s32.totalorder %s31, 3
      %p154 = por %p152, %p153
      %p155 = scmp.ne.s32.totalorder %s146, %s147
      %p156 = scmp.eq.s32.totalorder %s31, 0
      %p157 = por %p155, %p156
      %p158 = scmp.ne.s32.totalorder %s146, %s147
      %p159 = scmp.eq.s32.totalorder %s32, 3
      %p160 = por %p158, %p159
      %p162 = scmp.ne.s32.totalorder %s147, %s161
      %p163 = scmp.eq.s32.totalorder %s32, 0
      %p164 = por %p162, %p163
      %s166 = sadd.s32 %s165, 1
      %p169 = scmp.eq.s32.totalorder %s26, 3
      %p170 = scmp.ne.s32.totalorder %s165, %s167
      %p171 = scmp.eq.s32.totalorder %s26, 0
      %p172 = por %p170, %p171
      %p173 = scmp.ne.s32.totalorder %s165, %s167
      %p174 = scmp.eq.s32.totalorder %s31, 3
      %p175 = por %p173, %p174
      %p176 = scmp.ne.s32.totalorder %s167, %s168
      %p177 = scmp.eq.s32.totalorder %s31, 0
      %p178 = por %p176, %p177
      %p179 = scmp.ne.s32.totalorder %s167, %s168
      %p180 = scmp.eq.s32.totalorder %s32, 3
      %p181 = por %p179, %p180
      %p183 = scmp.ne.s32.totalorder %s168, %s182
      %p184 = scmp.eq.s32.totalorder %s32, 0
      %p185 = por %p183, %p184
      %s187 = sadd.s32 %s186, 1
      %p190 = scmp.eq.s32.totalorder %s26, 3
      %p191 = scmp.ne.s32.totalorder %s186, %s188
      %p192 = scmp.eq.s32.totalorder %s26, 0
      %p193 = por %p191, %p192
      %p194 = scmp.ne.s32.totalorder %s186, %s188
      %p195 = scmp.eq.s32.totalorder %s31, 3
      %p196 = por %p194, %p195
      %p197 = scmp.ne.s32.totalorder %s188, %s189
      %p198 = scmp.eq.s32.totalorder %s31, 0
      %p199 = por %p197, %p198
      %p200 = scmp.ne.s32.totalorder %s188, %s189
      %p201 = scmp.eq.s32.totalorder %s32, 3
      %p202 = por %p200, %p201
      %p204 = scmp.ne.s32.totalorder %s189, %s203
      %p205 = scmp.eq.s32.totalorder %s32, 0
      %p206 = por %p204, %p205
      %s208 = sadd.s32 %s207, 1
      %p211 = scmp.eq.s32.totalorder %s26, 3
      %p212 = scmp.ne.s32.totalorder %s207, %s209
      %p213 = scmp.eq.s32.totalorder %s26, 0
      %p214 = por %p212, %p213
      %p215 = scmp.ne.s32.totalorder %s207, %s209
      %p216 = scmp.eq.s32.totalorder %s31, 3
      %p217 = por %p215, %p216
      %p218 = scmp.ne.s32.totalorder %s209, %s210
      %p219 = scmp.eq.s32.totalorder %s31, 0
      %p220 = por %p218, %p219
      %p221 = scmp.ne.s32.totalorder %s209, %s210
      %p222 = scmp.eq.s32.totalorder %s32, 3
      %p223 = por %p221, %p222
      %p225 = scmp.ne.s32.totalorder %s210, %s224
      %p226 = scmp.eq.s32.totalorder %s32, 0
      %p227 = por %p225, %p226
      %s228 = ssub.s32 %s33, %s45
      %s229 = ssub.s32 %s34, %s41
      %s230 = sor.u32 %s228, %s229
      %p231 = scmp.eq.s32.totalorder %s230, 0
      %s233 = sadd.s32 %s232, 1
      %s234 = scalar_select %p231, %s232, %s233
      %p237 = pneg %p231
      %p238 = scmp.eq.s32.totalorder %s26, 3
      %p239 = por %p237, %p238
      %p240 = scmp.ne.s32.totalorder %s232, %s235
      %p241 = scmp.eq.s32.totalorder %s26, 0
      %p242 = por %p240, %p241
      %p243 = scmp.ne.s32.totalorder %s232, %s235
      %p244 = scmp.eq.s32.totalorder %s31, 3
      %p245 = por %p243, %p244
      %p246 = scmp.ne.s32.totalorder %s235, %s236
      %p247 = scmp.eq.s32.totalorder %s31, 0
      %p248 = por %p246, %p247
      %p249 = scmp.ne.s32.totalorder %s235, %s236
      %p250 = scmp.eq.s32.totalorder %s32, 3
      %p251 = por %p249, %p250
      %p253 = scmp.ne.s32.totalorder %s236, %s252
      %p254 = scmp.eq.s32.totalorder %s32, 0
      %p255 = por %p253, %p254
      %p256 = scmp.le.s32.totalorder 1, %s26
      %p257 = scmp.lt.s32.totalorder %s26, 5
      %p258 = pnand %p256, %p257
      %p259 = pneg %p258
      // Predicated region
      $region9: #{graph_attention_conv_layer.1} parent=5 // pred_check
        _
      $region10: #{graph_attention_conv_layer.1} parent=5 // pred_check_branch
        %261 = sbr.rel (%p258) target = $region12
      $region11: #{graph_attention_conv_layer.1} parent=5 // pred_region
        %s262 = ssub.s32 %s26, 1
        // Predicated region
        $region13: #{graph_attention_conv_layer.1} parent=11 // pred_check
          %p263 = pneg %p115
        $region14: #{graph_attention_conv_layer.1} parent=11 // pred_check_branch
          %265 = sbr.rel (%p263) target = $region16
        $region15: #{graph_attention_conv_layer.1} parent=11 // pred_region
          %s267 = ssub.s32 128, 128
          %268 = vsyncadd [#allocation6], %s267
          %s269 = sshll.u32 [#allocation7], 4
          %s270 = int_to_ptr.vmem [resolvable:$true] %s269
          %275 = dma.hbm_to_vmem [thread:$0]  %s2, 128, %s270, [#allocation6], 64, 64, 4
        $region16: #{graph_attention_conv_layer.1} parent=11 // pred_fallthru
          _
        // Predicated region
        $region17: #{graph_attention_conv_layer.1} parent=11 // pred_check
          %p276 = pneg %p136
        $region18: #{graph_attention_conv_layer.1} parent=11 // pred_check_branch
          %278 = sbr.rel (%p276) target = $region20
        $region19: #{graph_attention_conv_layer.1} parent=11 // pred_region
          %s280 = ssub.s32 16, 16
          %281 = vsyncadd [#allocation9], %s280
          %s283 = sshll.u32 [#allocation8], 4
          %s284 = int_to_ptr.vmem [resolvable:$true] %s283
          %286 = dma.hbm_to_vmem [thread:$0]  %s3, 16, %s284, [#allocation9]
        $region20: #{graph_attention_conv_layer.1} parent=11 // pred_fallthru
          _
        // Predicated region
        $region21: #{graph_attention_conv_layer.1} parent=11 // pred_check
          %p287 = pneg %p157
        $region22: #{graph_attention_conv_layer.1} parent=11 // pred_check_branch
          %289 = sbr.rel (%p287) target = $region24
        $region23: #{graph_attention_conv_layer.1} parent=11 // pred_region
          %s291 = ssub.s32 128, 128
          %292 = vsyncadd [#allocation9], %s291
          %s293 = sshll.u32 [#allocation10], 4
          %s294 = int_to_ptr.vmem [resolvable:$true] %s293
          %299 = dma.hbm_to_vmem [thread:$0]  %s4, 128, %s294, [#allocation9], 64, 64, 4
        $region24: #{graph_attention_conv_layer.1} parent=11 // pred_fallthru
          _
        // Predicated region
        $region25: #{graph_attention_conv_layer.1} parent=11 // pred_check
          %p300 = pneg %p178
        $region26: #{graph_attention_conv_layer.1} parent=11 // pred_check_branch
          %302 = sbr.rel (%p300) target = $region28
        $region27: #{graph_attention_conv_layer.1} parent=11 // pred_region
          %s304 = ssub.s32 16, 16
          %305 = vsyncadd [#allocation12], %s304
          %s307 = sshll.u32 [#allocation11], 4
          %s308 = int_to_ptr.vmem [resolvable:$true] %s307
          %310 = dma.hbm_to_vmem [thread:$0]  %s5, 16, %s308, [#allocation12]
        $region28: #{graph_attention_conv_layer.1} parent=11 // pred_fallthru
          _
        // Predicated region
        $region29: #{graph_attention_conv_layer.1} parent=11 // pred_check
          %p311 = pneg %p199
        $region30: #{graph_attention_conv_layer.1} parent=11 // pred_check_branch
          %313 = sbr.rel (%p311) target = $region32
        $region31: #{graph_attention_conv_layer.1} parent=11 // pred_region
          %s315 = ssub.s32 64, 64
          %316 = vsyncadd [#allocation12], %s315
          %s318 = sshll.u32 [#allocation13], 4
          %s319 = int_to_ptr.vmem [resolvable:$true] %s318
          %321 = dma.hbm_to_vmem [thread:$0]  %s6, 64, %s319, [#allocation12]
        $region32: #{graph_attention_conv_layer.1} parent=11 // pred_fallthru
          _
        // Predicated region
        $region33: #{graph_attention_conv_layer.1} parent=11 // pred_check
          %p322 = pneg %p220
        $region34: #{graph_attention_conv_layer.1} parent=11 // pred_check_branch
          %324 = sbr.rel (%p322) target = $region36
        $region35: #{graph_attention_conv_layer.1} parent=11 // pred_region
          %s326 = ssub.s32 256, 256
          %327 = vsyncadd [#allocation15], %s326
          %s328 = sshll.u32 [#allocation14], 4
          %s329 = int_to_ptr.vmem [resolvable:$true] %s328
          %334 = dma.hbm_to_vmem [thread:$0]  %s7, 256, %s329, [#allocation15], 64, 64, 4
        $region36: #{graph_attention_conv_layer.1} parent=11 // pred_fallthru
          _
      $region12: #{graph_attention_conv_layer.1} parent=5 // pred_fallthru
        _
      %p335 = scmp.lt.s32.totalorder %s26, 4
      // Predicated region
      $region37: #{graph_attention_conv_layer.1} parent=5 // pred_check
        %p336 = pneg %p335
      $region38: #{graph_attention_conv_layer.1} parent=5 // pred_check_branch
        %338 = sbr.rel (%p336) target = $region40
      $region39: #{graph_attention_conv_layer.1} parent=5 // pred_region
        // Predicated region
        $region41: #{graph_attention_conv_layer.1} parent=39 // pred_check
          %p339 = pneg %p60
        $region42: #{graph_attention_conv_layer.1} parent=39 // pred_check_branch
          %341 = sbr.rel (%p339) target = $region44
        $region43: #{graph_attention_conv_layer.1} parent=39 // pred_region
          %s342 = sand.u32 %s50, 1
          %s343 = scalar_lea.sflag [#allocation3], %s342
          %s344 = sand.u32 %s50, 1
          %s345 = smul.addr %s344, 32
          %s346 = scalar_lea.vmem [#allocation2], %s345
          %s347 = smul.u32 8, %s34
          %s349 = ssub.s32 512, 512
          %350 = vsyncadd %s343, %s349
          %s351 = smul.addr %s33, 16
          %s352 = sadd.s32 %s347, %s351
          %s353 = smul.addr %s352, 64
          %s354 = scalar_lea.hbm %s0, %s353
          %s355 = sshll.u32 %s346, 4
          %s356 = int_to_ptr.vmem [resolvable:$true] %s355
          %361 = dma.hbm_to_vmem [thread:$0]  %s354, 512, %s356, %s343, 64, 64, 4
        $region44: #{graph_attention_conv_layer.1} parent=39 // pred_fallthru
          _
        // Predicated region
        $region45: #{graph_attention_conv_layer.1} parent=39 // pred_check
          %p362 = pneg %p88
        $region46: #{graph_attention_conv_layer.1} parent=39 // pred_check_branch
          %364 = sbr.rel (%p362) target = $region48
        $region47: #{graph_attention_conv_layer.1} parent=39 // pred_region
          %s365 = sand.u32 %s26, 1
          %s366 = scalar_lea.sflag [#allocation6], %s365
          %s367 = sand.u32 %s78, 1
          %s368 = smul.addr %s367, 4
          %s369 = scalar_lea.vmem [#allocation5], %s368
          %s371 = ssub.s32 64, 64
          %372 = vsyncadd %s366, %s371
          %s373 = smul.addr %s33, 2
          %s374 = sadd.s32 %s34, %s373
          %s375 = smul.addr %s374, 64
          %s376 = scalar_lea.hbm %s1, %s375
          %s378 = sshll.u32 %s369, 4
          %s379 = int_to_ptr.vmem [resolvable:$true] %s378
          %381 = dma.hbm_to_vmem [thread:$0]  %s376, 64, %s379, %s366
        $region48: #{graph_attention_conv_layer.1} parent=39 // pred_fallthru
          _
      $region40: #{graph_attention_conv_layer.1} parent=5 // pred_fallthru
        _
      %p382 = scmp.le.s32.totalorder 1, %s26
      %p383 = scmp.lt.s32.totalorder %s26, 5
      %p384 = pnand %p382, %p383
      %p385 = pneg %p384
      // Predicated region
      $region49: #{graph_attention_conv_layer.1} parent=5 // pred_check
        _
      $region50: #{graph_attention_conv_layer.1} parent=5 // pred_check_branch
        %387 = sbr.rel (%p384) target = $region52
      $region51: #{graph_attention_conv_layer.1} parent=5 // pred_region
        %s388 = ssub.s32 %s26, 1
        %s389 = sand.u32 %s53, 1
        %s390 = scalar_lea.sflag [#allocation3], %s389
        %s391 = sand.u32 %s53, 1
        %s392 = smul.addr %s391, 32
        %s393 = scalar_lea.vmem [#allocation2], %s392
        // Predicated region
        $region53: #{graph_attention_conv_layer.1} parent=51 // pred_check
          %p394 = pneg %p66
        $region54: #{graph_attention_conv_layer.1} parent=51 // pred_check_branch
          %396 = sbr.rel (%p394) target = $region56
        $region55: #{graph_attention_conv_layer.1} parent=51 // pred_region
          %397 = dma.done %s390, 512
        $region56: #{graph_attention_conv_layer.1} parent=51 // pred_fallthru
          _
        %s398 = sand.u32 %s31, 1
        %s399 = scalar_lea.sflag [#allocation6], %s398
        %s400 = sand.u32 %s81, 1
        %s401 = smul.addr %s400, 4
        %s402 = scalar_lea.vmem [#allocation5], %s401
        // Predicated region
        $region57: #{graph_attention_conv_layer.1} parent=51 // pred_check
          %p403 = pneg %p94
        $region58: #{graph_attention_conv_layer.1} parent=51 // pred_check_branch
          %405 = sbr.rel (%p403) target = $region60
        $region59: #{graph_attention_conv_layer.1} parent=51 // pred_region
          %406 = dma.done %s399, 64
        $region60: #{graph_attention_conv_layer.1} parent=51 // pred_fallthru
          _
        // Predicated region
        $region61: #{graph_attention_conv_layer.1} parent=51 // pred_check
          %p407 = pneg %p115
        $region62: #{graph_attention_conv_layer.1} parent=51 // pred_check_branch
          %409 = sbr.rel (%p407) target = $region64
        $region63: #{graph_attention_conv_layer.1} parent=51 // pred_region
          %410 = dma.done [#allocation6], 128
        $region64: #{graph_attention_conv_layer.1} parent=51 // pred_fallthru
          _
        // Predicated region
        $region65: #{graph_attention_conv_layer.1} parent=51 // pred_check
          %p411 = pneg %p136
        $region66: #{graph_attention_conv_layer.1} parent=51 // pred_check_branch
          %413 = sbr.rel (%p411) target = $region68
        $region67: #{graph_attention_conv_layer.1} parent=51 // pred_region
          %414 = dma.done [#allocation9], 16
        $region68: #{graph_attention_conv_layer.1} parent=51 // pred_fallthru
          _
        // Predicated region
        $region69: #{graph_attention_conv_layer.1} parent=51 // pred_check
          %p415 = pneg %p157
        $region70: #{graph_attention_conv_layer.1} parent=51 // pred_check_branch
          %417 = sbr.rel (%p415) target = $region72
        $region71: #{graph_attention_conv_layer.1} parent=51 // pred_region
          %418 = dma.done [#allocation9], 128
        $region72: #{graph_attention_conv_layer.1} parent=51 // pred_fallthru
          _
        // Predicated region
        $region73: #{graph_attention_conv_layer.1} parent=51 // pred_check
          %p419 = pneg %p178
        $region74: #{graph_attention_conv_layer.1} parent=51 // pred_check_branch
          %421 = sbr.rel (%p419) target = $region76
        $region75: #{graph_attention_conv_layer.1} parent=51 // pred_region
          %422 = dma.done [#allocation12], 16
        $region76: #{graph_attention_conv_layer.1} parent=51 // pred_fallthru
          _
        // Predicated region
        $region77: #{graph_attention_conv_layer.1} parent=51 // pred_check
          %p423 = pneg %p199
        $region78: #{graph_attention_conv_layer.1} parent=51 // pred_check_branch
          %425 = sbr.rel (%p423) target = $region80
        $region79: #{graph_attention_conv_layer.1} parent=51 // pred_region
          %426 = dma.done [#allocation12], 64
        $region80: #{graph_attention_conv_layer.1} parent=51 // pred_fallthru
          _
        // Predicated region
        $region81: #{graph_attention_conv_layer.1} parent=51 // pred_check
          %p427 = pneg %p220
        $region82: #{graph_attention_conv_layer.1} parent=51 // pred_check_branch
          %429 = sbr.rel (%p427) target = $region84
        $region83: #{graph_attention_conv_layer.1} parent=51 // pred_region
          %430 = dma.done [#allocation15], 256
        $region84: #{graph_attention_conv_layer.1} parent=51 // pred_fallthru
          _
        %s431 = sand.u32 %s53, 1
        %s432 = scalar_lea.sflag [#allocation3], %s431
        %s433 = sand.u32 %s53, 1
        %s434 = smul.addr %s433, 32
        %s435 = scalar_lea.vmem [#allocation2], %s434
        %p436 = pneg %p66
        %p437 = pneg %p63
        %s438 = sand.u32 %s31, 1
        %s439 = scalar_lea.sflag [#allocation6], %s438
        %s440 = sand.u32 %s81, 1
        %s441 = smul.addr %s440, 4
        %s442 = scalar_lea.vmem [#allocation5], %s441
        %p443 = pneg %p94
        %p444 = pneg %p91
        %p445 = pneg %p115
        %p446 = pneg %p112
        %p447 = pneg %p136
        %p448 = pneg %p133
        %p449 = pneg %p157
        %p450 = pneg %p154
        %p451 = pneg %p178
        %p452 = pneg %p175
        %p453 = pneg %p199
        %p454 = pneg %p196
        %p455 = pneg %p220
        %p456 = pneg %p217
        %p457 = pneg %p248
        %p458 = pneg %p245
        %s459 = sand.u32 %s235, 1
        %s460 = scalar_lea.sflag [#allocation4], %s459
        %s461 = sand.u32 %s235, 1
        %s462 = smul.addr %s461, 8
        %s463 = scalar_lea.vmem [#allocation16], %s462
        %s464 = smul.u32 8, %s36
        %v468 = vld [vmem:[%s393] sm:$0xf]
        %v469 = vld [vmem:[%s393 + $0x4] sm:$0xf]
        %v470 = vld [vmem:[%s393 + $0x8] sm:$0xf]
        %v471 = vld [vmem:[%s393 + $0xc] sm:$0xf]
        %v472 = vld [vmem:[%s393 + $0x10] sm:$0xf]
        %v473 = vld [vmem:[%s393 + $0x14] sm:$0xf]
        %v474 = vld [vmem:[%s393 + $0x18] sm:$0xf]
        %v475 = vld [vmem:[%s393 + $0x1c] sm:$0xf]
        %v476 = vld [vmem:[%s402] sm:$0xf]
        %v477 = vld [vmem:[#allocation7] sm:$0xf]
        %v478 = vld [vmem:[#allocation7 + $0x4] sm:$0x1]
        %v479 = vld [vmem:[#allocation8] sm:$0x1]
        %v481 = vlaneseq
        %v482 = vshrl.u32 %v481, 7
        %v483 = vsub.s32 0, %v482
        %v484 = vrot.slane %v479, %v483
        %v494 = vunpack.c.l.b16 %v468
        %v495 = vunpack.c.l.b16 %v469
        %v496 = vunpack.c.l.b16 %v470
        %v497 = vunpack.c.l.b16 %v471
        %v498 = vunpack.c.l.b16 %v472
        %v499 = vunpack.c.l.b16 %v473
        %v500 = vunpack.c.l.b16 %v474
        %v501 = vunpack.c.l.b16 %v475
        %v502 = vpack.c.b16 %v495, %v494
        %v503 = vpack.c.b16 %v497, %v496
        %v504 = vpack.c.b16 %v499, %v498
        %v505 = vpack.c.b16 %v501, %v500
        %v508 = vunpack.c.l.b16 %v477
        %v509 = vunpack.c.l.b16 %v478
        %v510 = vpack.c.b16 %v509, %v508
        %vm511 = vcmask 72704
        %v513 = vsel %vm511, %v502, 0
        %v516 = vsel %vm511, %v503, 0
        %v519 = vsel %vm511, %v504, 0
        %v522 = vsel %vm511, %v505, 0
        %vm524 = vcmask 1043456
        %vm525 = vcmask 1044480
        %v526 = vsel %vm524, 4294967295, 65535
        %v527 = vsel %vm525, %v526, 0
        %v529 = vand.u32 %v510, %v527
        %531 = vmatprep.subr.bf16.mxu0 0
        %532 = vmatpush1.bf16.msra.mxu0 %v529
        %533 = vmatprep.subr.bf16.mxu0 0
        %534 = vmatpush1.bf16.msra.mxu0 0
        %535 = vmatprep.subr.bf16.mxu0 0
        %536 = vmatpush1.bf16.msra.mxu0 0
        %537 = vmatprep.subr.bf16.mxu0 0
        %538 = vmatpush1.bf16.msra.mxu0 0
        %539 = vmatprep.subr.bf16.mxu0 0
        %540 = vmatpush1.bf16.msra.mxu0 0
        %541 = vmatprep.subr.bf16.mxu0 0
        %542 = vmatpush1.bf16.msra.mxu0 0
        %543 = vmatprep.subr.bf16.mxu0 0
        %544 = vmatpush1.bf16.msra.mxu0 0
        %545 = vmatprep.subr.bf16.mxu0 0
        %546 = vmatpush1.bf16.msra.mxu0 0
        %547 = vmatprep.subr.bf16.mxu0 0
        %548 = vmatpush1.bf16.msra.mxu0 0
        %549 = vmatprep.subr.bf16.mxu0 0
        %550 = vmatpush1.bf16.msra.mxu0 0
        %551 = vmatprep.subr.bf16.mxu0 0
        %552 = vmatpush1.bf16.msra.mxu0 0
        %553 = vmatprep.subr.bf16.mxu0 0
        %554 = vmatpush1.bf16.msra.mxu0 0
        %555 = vmatprep.subr.bf16.mxu0 0
        %556 = vmatpush1.bf16.msra.mxu0 0
        %557 = vmatprep.subr.bf16.mxu0 0
        %558 = vmatpush1.bf16.msra.mxu0 0
        %559 = vmatprep.subr.bf16.mxu0 0
        %560 = vmatpush1.bf16.msra.mxu0 0
        %561 = vmatprep.subr.bf16.mxu0 0
        %562 = vmatpush1.bf16.msra.mxu0 0
        %563 = vmatprep.mubr.bf16.mxu0 0
        %564 = vmatmul.mubr.bf16.gmra.mrb[0].mxu0 %v513
        %v565 = vpop.f32.mrb[0].mxu0
        %v566 = vadd.f32 %v484, %v565
        %v567 = vpop.f32.mrb[0].mxu0
        %v568 = vpop.f32.mrb[0].mxu0
        %v569 = vadd.f32 %v484, %v568
        %v570 = vpop.f32.mrb[0].mxu0
        %571 = vmatprep.mubr.bf16.mxu0 0
        %572 = vmatmul.mubr.bf16.gmra.mrb[0].mxu0 %v516
        %v573 = vpop.f32.mrb[0].mxu0
        %v574 = vadd.f32 %v484, %v573
        %v575 = vpop.f32.mrb[0].mxu0
        %v576 = vpop.f32.mrb[0].mxu0
        %v577 = vadd.f32 %v484, %v576
        %v578 = vpop.f32.mrb[0].mxu0
        %579 = vmatprep.mubr.bf16.mxu0 0
        %580 = vmatmul.mubr.bf16.gmra.mrb[0].mxu0 %v519
        %v581 = vpop.f32.mrb[0].mxu0
        %v582 = vadd.f32 %v484, %v581
        %v583 = vpop.f32.mrb[0].mxu0
        %v584 = vpop.f32.mrb[0].mxu0
        %v585 = vadd.f32 %v484, %v584
        %v586 = vpop.f32.mrb[0].mxu0
        %587 = vmatprep.mubr.bf16.mxu0 0
        %588 = vmatmul.mubr.bf16.gmra.mrb[0].mxu0 %v522
        %v589 = vpop.f32.mrb[0].mxu0
        %v590 = vadd.f32 %v484, %v589
        %v591 = vpop.f32.mrb[0].mxu0
        %v592 = vpop.f32.mrb[0].mxu0
        %v593 = vadd.f32 %v484, %v592
        %v594 = vpop.f32.mrb[0].mxu0
        %595 = vdwg.mxu0
        %v596 = vmax.f32 %v566, 0.0
        %v597 = vmax.f32 %v569, 0.0
        %v598 = vmax.f32 %v574, 0.0
        %v599 = vmax.f32 %v577, 0.0
        %v600 = vmax.f32 %v582, 0.0
        %v601 = vmax.f32 %v585, 0.0
        %v602 = vmax.f32 %v590, 0.0
        %v603 = vmax.f32 %v593, 0.0
        %v604 = vpack.c.bf16 %v597, %v596
        %v605 = vpack.c.bf16 %v599, %v598
        %v606 = vpack.c.bf16 %v601, %v600
        %v607 = vpack.c.bf16 %v603, %v602
        %v608 = vld [vmem:[#allocation10] sm:$0xf]
        %v609 = vld [vmem:[#allocation10 + $0x4] sm:$0xf]
        %v610 = vld [vmem:[#allocation11] sm:$0x1]
        %v612 = vlaneseq
        %v613 = vshrl.u32 %v612, 7
        %v614 = vsub.s32 0, %v613
        %v615 = vrot.slane %v610, %v614
        %v619 = vunpack.c.l.b16 %v608
        %v620 = vunpack.c.l.b16 %v609
        %v621 = vpack.c.b16 %v620, %v619
        %vm623 = vcmask 130048
        %v625 = vsel %vm623, %v604, 0
        %v628 = vsel %vm623, %v605, 0
        %v631 = vsel %vm623, %v606, 0
        %v634 = vsel %vm623, %v607, 0
        %636 = vmatprep.subr.bf16.mxu0 0
        %637 = vmatpush1.bf16.msra.mxu0 %v621
        %638 = vmatprep.subr.bf16.mxu0 0
        %639 = vmatpush1.bf16.msra.mxu0 0
        %640 = vmatprep.subr.bf16.mxu0 0
        %641 = vmatpush1.bf16.msra.mxu0 0
        %642 = vmatprep.subr.bf16.mxu0 0
        %643 = vmatpush1.bf16.msra.mxu0 0
        %644 = vmatprep.subr.bf16.mxu0 0
        %645 = vmatpush1.bf16.msra.mxu0 0
        %646 = vmatprep.subr.bf16.mxu0 0
        %647 = vmatpush1.bf16.msra.mxu0 0
        %648 = vmatprep.subr.bf16.mxu0 0
        %649 = vmatpush1.bf16.msra.mxu0 0
        %650 = vmatprep.subr.bf16.mxu0 0
        %651 = vmatpush1.bf16.msra.mxu0 0
        %652 = vmatprep.subr.bf16.mxu0 0
        %653 = vmatpush1.bf16.msra.mxu0 0
        %654 = vmatprep.subr.bf16.mxu0 0
        %655 = vmatpush1.bf16.msra.mxu0 0
        %656 = vmatprep.subr.bf16.mxu0 0
        %657 = vmatpush1.bf16.msra.mxu0 0
        %658 = vmatprep.subr.bf16.mxu0 0
        %659 = vmatpush1.bf16.msra.mxu0 0
        %660 = vmatprep.subr.bf16.mxu0 0
        %661 = vmatpush1.bf16.msra.mxu0 0
        %662 = vmatprep.subr.bf16.mxu0 0
        %663 = vmatpush1.bf16.msra.mxu0 0
        %664 = vmatprep.subr.bf16.mxu0 0
        %665 = vmatpush1.bf16.msra.mxu0 0
        %666 = vmatprep.subr.bf16.mxu0 0
        %667 = vmatpush1.bf16.msra.mxu0 0
        %668 = vmatprep.mubr.bf16.mxu0 0
        %669 = vmatmul.mubr.bf16.gmra.mrb[0].mxu0 %v625
        %v670 = vpop.f32.mrb[0].mxu0
        %v671 = vadd.f32 %v615, %v670
        %v672 = vpop.f32.mrb[0].mxu0
        %v673 = vpop.f32.mrb[0].mxu0
        %v674 = vadd.f32 %v615, %v673
        %v675 = vpop.f32.mrb[0].mxu0
        %676 = vmatprep.mubr.bf16.mxu0 0
        %677 = vmatmul.mubr.bf16.gmra.mrb[0].mxu0 %v628
        %v678 = vpop.f32.mrb[0].mxu0
        %v679 = vadd.f32 %v615, %v678
        %v680 = vpop.f32.mrb[0].mxu0
        %v681 = vpop.f32.mrb[0].mxu0
        %v682 = vadd.f32 %v615, %v681
        %v683 = vpop.f32.mrb[0].mxu0
        %684 = vmatprep.mubr.bf16.mxu0 0
        %685 = vmatmul.mubr.bf16.gmra.mrb[0].mxu0 %v631
        %v686 = vpop.f32.mrb[0].mxu0
        %v687 = vadd.f32 %v615, %v686
        %v688 = vpop.f32.mrb[0].mxu0
        %v689 = vpop.f32.mrb[0].mxu0
        %v690 = vadd.f32 %v615, %v689
        %v691 = vpop.f32.mrb[0].mxu0
        %692 = vmatprep.mubr.bf16.mxu0 0
        %693 = vmatmul.mubr.bf16.gmra.mrb[0].mxu0 %v634
        %v694 = vpop.f32.mrb[0].mxu0
        %v695 = vadd.f32 %v615, %v694
        %v696 = vpop.f32.mrb[0].mxu0
        %v697 = vpop.f32.mrb[0].mxu0
        %v698 = vadd.f32 %v615, %v697
        %v699 = vpop.f32.mrb[0].mxu0
        %700 = vdwg.mxu0
        %v701 = vmax.f32 %v671, 0.0
        %v702 = vmax.f32 %v674, 0.0
        %v703 = vmax.f32 %v679, 0.0
        %v704 = vmax.f32 %v682, 0.0
        %v705 = vmax.f32 %v687, 0.0
        %v706 = vmax.f32 %v690, 0.0
        %v707 = vmax.f32 %v695, 0.0
        %v708 = vmax.f32 %v698, 0.0
        %v710 = vsel %vm511, %v476, 0
        %712 = vmatprep.subr.bf16.mxu0 0
        %713 = vmatpush1.bf16.msra.mxu0 %v529
        %714 = vmatprep.subr.bf16.mxu0 0
        %715 = vmatpush1.bf16.msra.mxu0 0
        %716 = vmatprep.subr.bf16.mxu0 0
        %717 = vmatpush1.bf16.msra.mxu0 0
        %718 = vmatprep.subr.bf16.mxu0 0
        %719 = vmatpush1.bf16.msra.mxu0 0
        %720 = vmatprep.subr.bf16.mxu0 0
        %721 = vmatpush1.bf16.msra.mxu0 0
        %722 = vmatprep.subr.bf16.mxu0 0
        %723 = vmatpush1.bf16.msra.mxu0 0
        %724 = vmatprep.subr.bf16.mxu0 0
        %725 = vmatpush1.bf16.msra.mxu0 0
        %726 = vmatprep.subr.bf16.mxu0 0
        %727 = vmatpush1.bf16.msra.mxu0 0
        %728 = vmatprep.subr.bf16.mxu0 0
        %729 = vmatpush1.bf16.msra.mxu0 0
        %730 = vmatprep.subr.bf16.mxu0 0
        %731 = vmatpush1.bf16.msra.mxu0 0
        %732 = vmatprep.subr.bf16.mxu0 0
        %733 = vmatpush1.bf16.msra.mxu0 0
        %734 = vmatprep.subr.bf16.mxu0 0
        %735 = vmatpush1.bf16.msra.mxu0 0
        %736 = vmatprep.subr.bf16.mxu0 0
        %737 = vmatpush1.bf16.msra.mxu0 0
        %738 = vmatprep.subr.bf16.mxu0 0
        %739 = vmatpush1.bf16.msra.mxu0 0
        %740 = vmatprep.subr.bf16.mxu0 0
        %741 = vmatpush1.bf16.msra.mxu0 0
        %742 = vmatprep.subr.bf16.mxu0 0
        %743 = vmatpush1.bf16.msra.mxu0 0
        %744 = vmatprep.mubr.bf16.mxu0 0
        %745 = vmatmul.mubr.bf16.gmra.mrb[0].mxu0 %v710
        %v746 = vpop.f32.mrb[0].mxu0
        %v747 = vadd.f32 %v484, %v746
        %v748 = vpop.f32.mrb[0].mxu0
        %v749 = vpop.f32.mrb[0].mxu0
        %v750 = vpop.f32.mrb[0].mxu0
        %751 = vdwg.mxu0
        %v752 = vmax.f32 %v747, 0.0
        %v753 = vpack.c.bf16 %v752, %v752
        %v755 = vsel %vm623, %v753, 0
        %757 = vmatprep.subr.bf16.mxu0 0
        %758 = vmatpush1.bf16.msra.mxu0 %v621
        %759 = vmatprep.subr.bf16.mxu0 0
        %760 = vmatpush1.bf16.msra.mxu0 0
        %761 = vmatprep.subr.bf16.mxu0 0
        %762 = vmatpush1.bf16.msra.mxu0 0
        %763 = vmatprep.subr.bf16.mxu0 0
        %764 = vmatpush1.bf16.msra.mxu0 0
        %765 = vmatprep.subr.bf16.mxu0 0
        %766 = vmatpush1.bf16.msra.mxu0 0
        %767 = vmatprep.subr.bf16.mxu0 0
        %768 = vmatpush1.bf16.msra.mxu0 0
        %769 = vmatprep.subr.bf16.mxu0 0
        %770 = vmatpush1.bf16.msra.mxu0 0
        %771 = vmatprep.subr.bf16.mxu0 0
        %772 = vmatpush1.bf16.msra.mxu0 0
        %773 = vmatprep.subr.bf16.mxu0 0
        %774 = vmatpush1.bf16.msra.mxu0 0
        %775 = vmatprep.subr.bf16.mxu0 0
        %776 = vmatpush1.bf16.msra.mxu0 0
        %777 = vmatprep.subr.bf16.mxu0 0
        %778 = vmatpush1.bf16.msra.mxu0 0
        %779 = vmatprep.subr.bf16.mxu0 0
        %780 = vmatpush1.bf16.msra.mxu0 0
        %781 = vmatprep.subr.bf16.mxu0 0
        %782 = vmatpush1.bf16.msra.mxu0 0
        %783 = vmatprep.subr.bf16.mxu0 0
        %784 = vmatpush1.bf16.msra.mxu0 0
        %785 = vmatprep.subr.bf16.mxu0 0
        %786 = vmatpush1.bf16.msra.mxu0 0
        %787 = vmatprep.subr.bf16.mxu0 0
        %788 = vmatpush1.bf16.msra.mxu0 0
        %789 = vmatprep.mubr.bf16.mxu0 0
        %790 = vmatmul.mubr.bf16.gmra.mrb[0].mxu0 %v755
        %v791 = vpop.f32.mrb[0].mxu0
        %v792 = vadd.f32 %v615, %v791
        %v793 = vpop.f32.mrb[0].mxu0
        %v794 = vpop.f32.mrb[0].mxu0
        %v795 = vpop.f32.mrb[0].mxu0
        %796 = vdwg.mxu0
        %v797 = vmax.f32 %v792, 0.0
        %v798 = vpack.c.bf16 %v702, %v701
        %v799 = vpack.c.bf16 %v704, %v703
        %v800 = vpack.c.bf16 %v706, %v705
        %v801 = vpack.c.bf16 %v708, %v707
        %v802 = vpack.c.bf16 %v797, %v797
        %v803 = vld [vmem:[#allocation14] sm:$0xf]
        %v804 = vld [vmem:[#allocation14 + $0x4] sm:$0xf]
        %v805 = vld [vmem:[#allocation14 + $0x8] sm:$0xf]
        %v806 = vld [vmem:[#allocation14 + $0xc] sm:$0xf]
        %v811 = vunpack.c.l.b16 %v803
        %v812 = vunpack.c.l.b16 %v804
        %v813 = vunpack.c.l.b16 %v805
        %v814 = vunpack.c.l.b16 %v806
        %v815 = vpack.c.b16 %v812, %v811
        %v816 = vpack.c.b16 %v814, %v813
        %vm819 = vcmask 261120
        %v821 = vsel %vm819, %v798, 0
        %v824 = vsel %vm819, %v799, 0
        %v827 = vsel %vm819, %v800, 0
        %v830 = vsel %vm819, %v801, 0
        %832 = vmatprep.subr.bf16.mxu0 0
        %833 = vmatpush1.bf16.msra.mxu0 %v815
        %834 = vmatprep.subr.bf16.mxu0 0
        %835 = vmatpush1.bf16.msra.mxu0 %v816
        %836 = vmatprep.subr.bf16.mxu0 0
        %837 = vmatpush1.bf16.msra.mxu0 0
        %838 = vmatprep.subr.bf16.mxu0 0
        %839 = vmatpush1.bf16.msra.mxu0 0
        %840 = vmatprep.subr.bf16.mxu0 0
        %841 = vmatpush1.bf16.msra.mxu0 0
        %842 = vmatprep.subr.bf16.mxu0 0
        %843 = vmatpush1.bf16.msra.mxu0 0
        %844 = vmatprep.subr.bf16.mxu0 0
        %845 = vmatpush1.bf16.msra.mxu0 0
        %846 = vmatprep.subr.bf16.mxu0 0
        %847 = vmatpush1.bf16.msra.mxu0 0
        %848 = vmatprep.subr.bf16.mxu0 0
        %849 = vmatpush1.bf16.msra.mxu0 0
        %850 = vmatprep.subr.bf16.mxu0 0
        %851 = vmatpush1.bf16.msra.mxu0 0
        %852 = vmatprep.subr.bf16.mxu0 0
        %853 = vmatpush1.bf16.msra.mxu0 0
        %854 = vmatprep.subr.bf16.mxu0 0
        %855 = vmatpush1.bf16.msra.mxu0 0
        %856 = vmatprep.subr.bf16.mxu0 0
        %857 = vmatpush1.bf16.msra.mxu0 0
        %858 = vmatprep.subr.bf16.mxu0 0
        %859 = vmatpush1.bf16.msra.mxu0 0
        %860 = vmatprep.subr.bf16.mxu0 0
        %861 = vmatpush1.bf16.msra.mxu0 0
        %862 = vmatprep.subr.bf16.mxu0 0
        %863 = vmatpush1.bf16.msra.mxu0 0
        %864 = vmatprep.mubr.bf16.mxu0 0
        %865 = vmatmul.mubr.bf16.gmra.mrb[0].mxu0 %v821
        %v866 = vpop.f32.mrb[0].mxu0
        %v867 = vadd.f32 0.0, %v866
        %v868 = vpop.f32.mrb[0].mxu0
        %v869 = vpop.f32.mrb[0].mxu0
        %v870 = vadd.f32 0.0, %v869
        %v871 = vpop.f32.mrb[0].mxu0
        %872 = vmatprep.mubr.bf16.mxu0 0
        %873 = vmatmul.mubr.bf16.gmra.mrb[0].mxu0 %v824
        %v874 = vpop.f32.mrb[0].mxu0
        %v875 = vadd.f32 0.0, %v874
        %v876 = vpop.f32.mrb[0].mxu0
        %v877 = vpop.f32.mrb[0].mxu0
        %v878 = vadd.f32 0.0, %v877
        %v879 = vpop.f32.mrb[0].mxu0
        %880 = vmatprep.mubr.bf16.mxu0 0
        %881 = vmatmul.mubr.bf16.gmra.mrb[0].mxu0 %v827
        %v882 = vpop.f32.mrb[0].mxu0
        %v883 = vadd.f32 0.0, %v882
        %v884 = vpop.f32.mrb[0].mxu0
        %v885 = vpop.f32.mrb[0].mxu0
        %v886 = vadd.f32 0.0, %v885
        %v887 = vpop.f32.mrb[0].mxu0
        %888 = vmatprep.mubr.bf16.mxu0 0
        %889 = vmatmul.mubr.bf16.gmra.mrb[0].mxu0 %v830
        %v890 = vpop.f32.mrb[0].mxu0
        %v891 = vadd.f32 0.0, %v890
        %v892 = vpop.f32.mrb[0].mxu0
        %v893 = vpop.f32.mrb[0].mxu0
        %v894 = vadd.f32 0.0, %v893
        %v895 = vpop.f32.mrb[0].mxu0
        %896 = vdwg.mxu0
        %v898 = vsel %vm819, %v802, 0
        %900 = vmatprep.subr.bf16.mxu0 0
        %901 = vmatpush1.bf16.msra.mxu0 %v815
        %902 = vmatprep.subr.bf16.mxu0 0
        %903 = vmatpush1.bf16.msra.mxu0 %v816
        %904 = vmatprep.subr.bf16.mxu0 0
        %905 = vmatpush1.bf16.msra.mxu0 0
        %906 = vmatprep.subr.bf16.mxu0 0
        %907 = vmatpush1.bf16.msra.mxu0 0
        %908 = vmatprep.subr.bf16.mxu0 0
        %909 = vmatpush1.bf16.msra.mxu0 0
        %910 = vmatprep.subr.bf16.mxu0 0
        %911 = vmatpush1.bf16.msra.mxu0 0
        %912 = vmatprep.subr.bf16.mxu0 0
        %913 = vmatpush1.bf16.msra.mxu0 0
        %914 = vmatprep.subr.bf16.mxu0 0
        %915 = vmatpush1.bf16.msra.mxu0 0
        %916 = vmatprep.subr.bf16.mxu0 0
        %917 = vmatpush1.bf16.msra.mxu0 0
        %918 = vmatprep.subr.bf16.mxu0 0
        %919 = vmatpush1.bf16.msra.mxu0 0
        %920 = vmatprep.subr.bf16.mxu0 0
        %921 = vmatpush1.bf16.msra.mxu0 0
        %922 = vmatprep.subr.bf16.mxu0 0
        %923 = vmatpush1.bf16.msra.mxu0 0
        %924 = vmatprep.subr.bf16.mxu0 0
        %925 = vmatpush1.bf16.msra.mxu0 0
        %926 = vmatprep.subr.bf16.mxu0 0
        %927 = vmatpush1.bf16.msra.mxu0 0
        %928 = vmatprep.subr.bf16.mxu0 0
        %929 = vmatpush1.bf16.msra.mxu0 0
        %930 = vmatprep.subr.bf16.mxu0 0
        %931 = vmatpush1.bf16.msra.mxu0 0
        %932 = vmatprep.mubr.bf16.mxu0 0
        %933 = vmatmul.mubr.bf16.gmra.mrb[0].mxu0 %v898
        %v934 = vpop.f32.mrb[0].mxu0
        %v935 = vadd.f32 0.0, %v934
        %v936 = vpop.f32.mrb[0].mxu0
        %v937 = vpop.f32.mrb[0].mxu0
        %v938 = vpop.f32.mrb[0].mxu0
        %939 = vdwg.mxu0
        %v940 = vpack.c.bf16 %v870, %v867
        %v941 = vpack.c.bf16 %v878, %v875
        %v942 = vpack.c.bf16 %v886, %v883
        %v943 = vpack.c.bf16 %v894, %v891
        %v948 = vunpack.c.l.b16 %v940
        %v949 = vunpack.c.h.b16 %v940
        %v950 = vunpack.c.l.b16 %v941
        %v951 = vunpack.c.h.b16 %v941
        %v952 = vunpack.c.l.b16 %v942
        %v953 = vunpack.c.h.b16 %v942
        %v954 = vunpack.c.l.b16 %v943
        %v955 = vunpack.c.h.b16 %v943
        %v956 = vpack.c.b16 %v948, %v948
        %v957 = vpack.c.b16 %v949, %v949
        %v958 = vpack.c.b16 %v950, %v950
        %v959 = vpack.c.b16 %v951, %v951
        %v960 = vpack.c.b16 %v952, %v952
        %v961 = vpack.c.b16 %v953, %v953
        %v962 = vpack.c.b16 %v954, %v954
        %v963 = vpack.c.b16 %v955, %v955
        %v972 = vpack.c.bf16 %v935, %v935
        %v975 = vunpack.c.l.s4 1966171168
        %v976 = vunpack.c.0.s8 %v975
        %v977 = vlaneseq
        %v978 = vshrl.u32 %v977, 7
        %v979 = vsub.s32 %v976, %v978
        %v980 = vrot.slane %v972, %v979
        %v981 = vcombine.high %v980, %v980
        %v983 = vunpack.c.l.s4 1966171168
        %v984 = vunpack.c.0.s8 %v983
        %v985 = vlaneseq
        %v986 = vshrl.u32 %v985, 7
        %v987 = vsub.s32 %v984, %v986
        %v988 = vrot.slane %v980, %v987
        %v990 = vunpack.c.l.s4 1966171168
        %v991 = vunpack.c.0.s8 %v990
        %v992 = vlaneseq
        %v993 = vshrl.u32 %v992, 7
        %v994 = vsub.s32 %v991, %v993
        %v995 = vrot.slane %v981, %v994
        %v996 = vcombine.high %v988, %v988
        %v997 = vcombine.high %v995, %v995
        %v998 = vunpack.i.l.s16 %v988
        %v999 = vunpack.i.h.s16 %v988
        %v1000 = vunpack.i.l.s16 %v995
        %v1001 = vunpack.i.h.s16 %v995
        %v1002 = vunpack.i.l.s16 %v996
        %v1003 = vunpack.i.h.s16 %v996
        %v1004 = vunpack.i.l.s16 %v997
        %v1005 = vunpack.i.h.s16 %v997
        %v1006 = vld [vmem:[#allocation13] sm:$0x7]
        %v1007 = vpack.c.bf16 %v1006, %v1006
        %vm1008 = vcmask 23552
        %v1009 = vsel %vm1008, %v502, 0
        %v1011 = vsel %vm1008, %v503, 0
        %v1013 = vsel %vm1008, %v504, 0
        %v1015 = vsel %vm1008, %v505, 0
        %vm1017 = vcmask 1040384
        %vm1018 = vcmask 1041408
        %v1019 = vsel %vm1017, 4294967295, 65535
        %v1020 = vsel %vm1018, %v1019, 0
        %v1022 = vand.u32 %v1007, %v1020
        %1024 = vmatprep.subr.bf16.mxu0 0
        %1025 = vmatpush1.bf16.msra.mxu0 %v1022
        %1026 = vmatprep.subr.bf16.mxu0 0
        %1027 = vmatpush1.bf16.msra.mxu0 0
        %1028 = vmatprep.subr.bf16.mxu0 0
        %1029 = vmatpush1.bf16.msra.mxu0 0
        %1030 = vmatprep.subr.bf16.mxu0 0
        %1031 = vmatpush1.bf16.msra.mxu0 0
        %1032 = vmatprep.subr.bf16.mxu0 0
        %1033 = vmatpush1.bf16.msra.mxu0 0
        %1034 = vmatprep.subr.bf16.mxu0 0
        %1035 = vmatpush1.bf16.msra.mxu0 0
        %1036 = vmatprep.subr.bf16.mxu0 0
        %1037 = vmatpush1.bf16.msra.mxu0 0
        %1038 = vmatprep.subr.bf16.mxu0 0
        %1039 = vmatpush1.bf16.msra.mxu0 0
        %1040 = vmatprep.subr.bf16.mxu0 0
        %1041 = vmatpush1.bf16.msra.mxu0 0
        %1042 = vmatprep.subr.bf16.mxu0 0
        %1043 = vmatpush1.bf16.msra.mxu0 0
        %1044 = vmatprep.subr.bf16.mxu0 0
        %1045 = vmatpush1.bf16.msra.mxu0 0
        %1046 = vmatprep.subr.bf16.mxu0 0
        %1047 = vmatpush1.bf16.msra.mxu0 0
        %1048 = vmatprep.subr.bf16.mxu0 0
        %1049 = vmatpush1.bf16.msra.mxu0 0
        %1050 = vmatprep.subr.bf16.mxu0 0
        %1051 = vmatpush1.bf16.msra.mxu0 0
        %1052 = vmatprep.subr.bf16.mxu0 0
        %1053 = vmatpush1.bf16.msra.mxu0 0
        %1054 = vmatprep.subr.bf16.mxu0 0
        %1055 = vmatpush1.bf16.msra.mxu0 0
        %1056 = vmatprep.mubr.bf16.mxu0 0
        %1057 = vmatmul.mubr.bf16.gmra.mrb[0].mxu0 %v1009
        %v1058 = vpop.f32.mrb[0].mxu0
        %v1059 = vadd.f32 0.0, %v1058
        %v1060 = vpop.f32.mrb[0].mxu0
        %v1061 = vpop.f32.mrb[0].mxu0
        %v1062 = vadd.f32 0.0, %v1061
        %v1063 = vpop.f32.mrb[0].mxu0
        %1064 = vmatprep.mubr.bf16.mxu0 0
        %1065 = vmatmul.mubr.bf16.gmra.mrb[0].mxu0 %v1011
        %v1066 = vpop.f32.mrb[0].mxu0
        %v1067 = vadd.f32 0.0, %v1066
        %v1068 = vpop.f32.mrb[0].mxu0
        %v1069 = vpop.f32.mrb[0].mxu0
        %v1070 = vadd.f32 0.0, %v1069
        %v1071 = vpop.f32.mrb[0].mxu0
        %1072 = vmatprep.mubr.bf16.mxu0 0
        %1073 = vmatmul.mubr.bf16.gmra.mrb[0].mxu0 %v1013
        %v1074 = vpop.f32.mrb[0].mxu0
        %v1075 = vadd.f32 0.0, %v1074
        %v1076 = vpop.f32.mrb[0].mxu0
        %v1077 = vpop.f32.mrb[0].mxu0
        %v1078 = vadd.f32 0.0, %v1077
        %v1079 = vpop.f32.mrb[0].mxu0
        %1080 = vmatprep.mubr.bf16.mxu0 0
        %1081 = vmatmul.mubr.bf16.gmra.mrb[0].mxu0 %v1015
        %v1082 = vpop.f32.mrb[0].mxu0
        %v1083 = vadd.f32 0.0, %v1082
        %v1084 = vpop.f32.mrb[0].mxu0
        %v1085 = vpop.f32.mrb[0].mxu0
        %v1086 = vadd.f32 0.0, %v1085
        %v1087 = vpop.f32.mrb[0].mxu0
        %1088 = vdwg.mxu0
        %v1089 = vpack.c.bf16 %v1062, %v1059
        %v1090 = vpack.c.bf16 %v1070, %v1067
        %v1091 = vpack.c.bf16 %v1078, %v1075
        %v1092 = vpack.c.bf16 %v1086, %v1083
        %v1097 = vunpack.c.l.b16 %v1089
        %v1098 = vunpack.c.h.b16 %v1089
        %v1099 = vunpack.c.l.b16 %v1090
        %v1100 = vunpack.c.h.b16 %v1090
        %v1101 = vunpack.c.l.b16 %v1091
        %v1102 = vunpack.c.h.b16 %v1091
        %v1103 = vunpack.c.l.b16 %v1092
        %v1104 = vunpack.c.h.b16 %v1092
        %v1105 = vpack.c.b16 %v1097, %v1097
        %v1106 = vpack.c.b16 %v1098, %v1098
        %v1107 = vpack.c.b16 %v1099, %v1099
        %v1108 = vpack.c.b16 %v1100, %v1100
        %v1109 = vpack.c.b16 %v1101, %v1101
        %v1110 = vpack.c.b16 %v1102, %v1102
        %v1111 = vpack.c.b16 %v1103, %v1103
        %v1112 = vpack.c.b16 %v1104, %v1104
        %v1121 = vpack.i.b16 %v998, %v998
        %v1122 = vpack.i.b16 %v999, %v999
        %v1123 = vpack.i.b16 %v1000, %v1000
        %v1124 = vpack.i.b16 %v1001, %v1001
        %v1125 = vpack.i.b16 %v1002, %v1002
        %v1126 = vpack.i.b16 %v1003, %v1003
        %v1127 = vpack.i.b16 %v1004, %v1004
        %v1128 = vpack.i.b16 %v1005, %v1005
        %v1129 = vlaneseq
        %v1130 = vshrl.u32 %v1129, 7
        %v1131 = vsub.s32 0, %v1130
        %v1132 = vrot.slane %v1121, %v1131
        %v1133 = vlaneseq
        %v1134 = vshrl.u32 %v1133, 7
        %v1135 = vsub.s32 0, %v1134
        %v1136 = vrot.slane %v1122, %v1135
        %v1137 = vlaneseq
        %v1138 = vshrl.u32 %v1137, 7
        %v1139 = vsub.s32 0, %v1138
        %v1140 = vrot.slane %v1123, %v1139
        %v1141 = vlaneseq
        %v1142 = vshrl.u32 %v1141, 7
        %v1143 = vsub.s32 0, %v1142
        %v1144 = vrot.slane %v1124, %v1143
        %v1145 = vlaneseq
        %v1146 = vshrl.u32 %v1145, 7
        %v1147 = vsub.s32 0, %v1146
        %v1148 = vrot.slane %v1125, %v1147
        %v1149 = vlaneseq
        %v1150 = vshrl.u32 %v1149, 7
        %v1151 = vsub.s32 0, %v1150
        %v1152 = vrot.slane %v1126, %v1151
        %v1153 = vlaneseq
        %v1154 = vshrl.u32 %v1153, 7
        %v1155 = vsub.s32 0, %v1154
        %v1156 = vrot.slane %v1127, %v1155
        %v1157 = vlaneseq
        %v1158 = vshrl.u32 %v1157, 7
        %v1159 = vsub.s32 0, %v1158
        %v1160 = vrot.slane %v1128, %v1159
        %v1162 = vpack.i.b16 %v1132, %v1132
        %v1164 = vlaneseq
        %v1165 = vshrl.u32 %v1164, 7
        %v1166 = vsub.s32 0, %v1165
        %v1167 = vrot.slane %v1162, %v1166
        %v1169 = vpack.i.b16 %v1136, %v1136
        %v1171 = vlaneseq
        %v1172 = vshrl.u32 %v1171, 7
        %v1173 = vsub.s32 0, %v1172
        %v1174 = vrot.slane %v1169, %v1173
        %v1176 = vpack.i.b16 %v1140, %v1140
        %v1178 = vlaneseq
        %v1179 = vshrl.u32 %v1178, 7
        %v1180 = vsub.s32 0, %v1179
        %v1181 = vrot.slane %v1176, %v1180
        %v1183 = vpack.i.b16 %v1144, %v1144
        %v1185 = vlaneseq
        %v1186 = vshrl.u32 %v1185, 7
        %v1187 = vsub.s32 0, %v1186
        %v1188 = vrot.slane %v1183, %v1187
        %v1190 = vpack.i.b16 %v1148, %v1148
        %v1192 = vlaneseq
        %v1193 = vshrl.u32 %v1192, 7
        %v1194 = vsub.s32 0, %v1193
        %v1195 = vrot.slane %v1190, %v1194
        %v1197 = vpack.i.b16 %v1152, %v1152
        %v1199 = vlaneseq
        %v1200 = vshrl.u32 %v1199, 7
        %v1201 = vsub.s32 0, %v1200
        %v1202 = vrot.slane %v1197, %v1201
        %v1204 = vpack.i.b16 %v1156, %v1156
        %v1206 = vlaneseq
        %v1207 = vshrl.u32 %v1206, 7
        %v1208 = vsub.s32 0, %v1207
        %v1209 = vrot.slane %v1204, %v1208
        %v1211 = vpack.i.b16 %v1160, %v1160
        %v1213 = vlaneseq
        %v1214 = vshrl.u32 %v1213, 7
        %v1215 = vsub.s32 0, %v1214
        %v1216 = vrot.slane %v1211, %v1215
        %v1217 = vsub.bf16 %v1167, %v956
        %v1218 = vsub.bf16 %v1174, %v957
        %v1219 = vsub.bf16 %v1181, %v958
        %v1220 = vsub.bf16 %v1188, %v959
        %v1221 = vsub.bf16 %v1195, %v960
        %v1222 = vsub.bf16 %v1202, %v961
        %v1223 = vsub.bf16 %v1209, %v962
        %v1224 = vsub.bf16 %v1216, %v963
        %v1225 = vadd.bf16 %v1217, %v1105
        %v1226 = vadd.bf16 %v1218, %v1106
        %v1227 = vadd.bf16 %v1219, %v1107
        %v1228 = vadd.bf16 %v1220, %v1108
        %v1229 = vadd.bf16 %v1221, %v1109
        %v1230 = vadd.bf16 %v1222, %v1110
        %v1231 = vadd.bf16 %v1223, %v1111
        %v1232 = vadd.bf16 %v1224, %v1112
        %vm1233 = vcmp.ge.bf16.partialorder %v1225, 0
        %vm1234 = vcmp.ge.bf16.partialorder %v1226, 0
        %vm1235 = vcmp.ge.bf16.partialorder %v1227, 0
        %vm1236 = vcmp.ge.bf16.partialorder %v1228, 0
        %vm1237 = vcmp.ge.bf16.partialorder %v1229, 0
        %vm1238 = vcmp.ge.bf16.partialorder %v1230, 0
        %vm1239 = vcmp.ge.bf16.partialorder %v1231, 0
        %vm1240 = vcmp.ge.bf16.partialorder %v1232, 0
        %v1241 = vmul.bf16 %v1225, 1045249613
        %v1242 = vmul.bf16 %v1226, 1045249613
        %v1243 = vmul.bf16 %v1227, 1045249613
        %v1244 = vmul.bf16 %v1228, 1045249613
        %v1245 = vmul.bf16 %v1229, 1045249613
        %v1246 = vmul.bf16 %v1230, 1045249613
        %v1247 = vmul.bf16 %v1231, 1045249613
        %v1248 = vmul.bf16 %v1232, 1045249613
        %v1249 = vsel %vm1233, %v1225, %v1241
        %v1250 = vsel %vm1234, %v1226, %v1242
        %v1251 = vsel %vm1235, %v1227, %v1243
        %v1252 = vsel %vm1236, %v1228, %v1244
        %v1253 = vsel %vm1237, %v1229, %v1245
        %v1254 = vsel %vm1238, %v1230, %v1246
        %v1255 = vsel %vm1239, %v1231, %v1247
        %v1256 = vsel %vm1240, %v1232, %v1248
        %vm1257 = vcmask 257024
        %v1260 = vsel %vm1257, %v1249, 4286644096
        %v1262 = vunpack.i.l.bf16 %v1260
        %v1263 = vunpack.i.h.bf16 %v1260
        %v1264 = vmax.f32 %v1262, %v1263
        %v1265 = vrot.slane %v1264, 4
        %v1266 = vmax.f32 %v1264, %v1265
        %v1267 = vrot.slane %v1266, 2
        %v1268 = vmax.f32 %v1266, %v1267
        %v1269 = vrot.slane %v1268, 1
        %v1270 = vmax.f32 %v1268, %v1269
        %v1271 = vpack.i.bf16 %v1270, %v1270
        %v1273 = vsel %vm1257, %v1250, 4286644096
        %v1275 = vunpack.i.l.bf16 %v1273
        %v1276 = vunpack.i.h.bf16 %v1273
        %v1277 = vmax.f32 %v1275, %v1276
        %v1278 = vrot.slane %v1277, 4
        %v1279 = vmax.f32 %v1277, %v1278
        %v1280 = vrot.slane %v1279, 2
        %v1281 = vmax.f32 %v1279, %v1280
        %v1282 = vrot.slane %v1281, 1
        %v1283 = vmax.f32 %v1281, %v1282
        %v1284 = vpack.i.bf16 %v1283, %v1283
        %v1286 = vsel %vm1257, %v1251, 4286644096
        %v1288 = vunpack.i.l.bf16 %v1286
        %v1289 = vunpack.i.h.bf16 %v1286
        %v1290 = vmax.f32 %v1288, %v1289
        %v1291 = vrot.slane %v1290, 4
        %v1292 = vmax.f32 %v1290, %v1291
        %v1293 = vrot.slane %v1292, 2
        %v1294 = vmax.f32 %v1292, %v1293
        %v1295 = vrot.slane %v1294, 1
        %v1296 = vmax.f32 %v1294, %v1295
        %v1297 = vpack.i.bf16 %v1296, %v1296
        %v1299 = vsel %vm1257, %v1252, 4286644096
        %v1301 = vunpack.i.l.bf16 %v1299
        %v1302 = vunpack.i.h.bf16 %v1299
        %v1303 = vmax.f32 %v1301, %v1302
        %v1304 = vrot.slane %v1303, 4
        %v1305 = vmax.f32 %v1303, %v1304
        %v1306 = vrot.slane %v1305, 2
        %v1307 = vmax.f32 %v1305, %v1306
        %v1308 = vrot.slane %v1307, 1
        %v1309 = vmax.f32 %v1307, %v1308
        %v1310 = vpack.i.bf16 %v1309, %v1309
        %v1312 = vsel %vm1257, %v1253, 4286644096
        %v1314 = vunpack.i.l.bf16 %v1312
        %v1315 = vunpack.i.h.bf16 %v1312
        %v1316 = vmax.f32 %v1314, %v1315
        %v1317 = vrot.slane %v1316, 4
        %v1318 = vmax.f32 %v1316, %v1317
        %v1319 = vrot.slane %v1318, 2
        %v1320 = vmax.f32 %v1318, %v1319
        %v1321 = vrot.slane %v1320, 1
        %v1322 = vmax.f32 %v1320, %v1321
        %v1323 = vpack.i.bf16 %v1322, %v1322
        %v1325 = vsel %vm1257, %v1254, 4286644096
        %v1327 = vunpack.i.l.bf16 %v1325
        %v1328 = vunpack.i.h.bf16 %v1325
        %v1329 = vmax.f32 %v1327, %v1328
        %v1330 = vrot.slane %v1329, 4
        %v1331 = vmax.f32 %v1329, %v1330
        %v1332 = vrot.slane %v1331, 2
        %v1333 = vmax.f32 %v1331, %v1332
        %v1334 = vrot.slane %v1333, 1
        %v1335 = vmax.f32 %v1333, %v1334
        %v1336 = vpack.i.bf16 %v1335, %v1335
        %v1338 = vsel %vm1257, %v1255, 4286644096
        %v1340 = vunpack.i.l.bf16 %v1338
        %v1341 = vunpack.i.h.bf16 %v1338
        %v1342 = vmax.f32 %v1340, %v1341
        %v1343 = vrot.slane %v1342, 4
        %v1344 = vmax.f32 %v1342, %v1343
        %v1345 = vrot.slane %v1344, 2
        %v1346 = vmax.f32 %v1344, %v1345
        %v1347 = vrot.slane %v1346, 1
        %v1348 = vmax.f32 %v1346, %v1347
        %v1349 = vpack.i.bf16 %v1348, %v1348
        %v1351 = vsel %vm1257, %v1256, 4286644096
        %v1353 = vunpack.i.l.bf16 %v1351
        %v1354 = vunpack.i.h.bf16 %v1351
        %v1355 = vmax.f32 %v1353, %v1354
        %v1356 = vrot.slane %v1355, 4
        %v1357 = vmax.f32 %v1355, %v1356
        %v1358 = vrot.slane %v1357, 2
        %v1359 = vmax.f32 %v1357, %v1358
        %v1360 = vrot.slane %v1359, 1
        %v1361 = vmax.f32 %v1359, %v1360
        %v1362 = vpack.i.bf16 %v1361, %v1361
        %v1363 = vsub.bf16 %v1249, %v1271
        %v1364 = vsub.bf16 %v1250, %v1284
        %v1365 = vsub.bf16 %v1251, %v1297
        %v1366 = vsub.bf16 %v1252, %v1310
        %v1367 = vsub.bf16 %v1253, %v1323
        %v1368 = vsub.bf16 %v1254, %v1336
        %v1369 = vsub.bf16 %v1255, %v1349
        %v1370 = vsub.bf16 %v1256, %v1362
        %v1372 = vmul.bf16 %v1363, 1069105081
        %v1373 = vpow.bf16.pop %v1372
        %v1375 = vmul.bf16 %v1364, 1069105081
        %v1376 = vpow.bf16.pop %v1375
        %v1378 = vmul.bf16 %v1365, 1069105081
        %v1379 = vpow.bf16.pop %v1378
        %v1381 = vmul.bf16 %v1366, 1069105081
        %v1382 = vpow.bf16.pop %v1381
        %v1384 = vmul.bf16 %v1367, 1069105081
        %v1385 = vpow.bf16.pop %v1384
        %v1387 = vmul.bf16 %v1368, 1069105081
        %v1388 = vpow.bf16.pop %v1387
        %v1390 = vmul.bf16 %v1369, 1069105081
        %v1391 = vpow.bf16.pop %v1390
        %v1393 = vmul.bf16 %v1370, 1069105081
        %v1394 = vpow.bf16.pop %v1393
        %v1395 = vunpack.c.l.bf16 %v1373
        %v1396 = vunpack.c.l.bf16 %v1376
        %v1397 = vunpack.c.l.bf16 %v1379
        %v1398 = vunpack.c.l.bf16 %v1382
        %v1399 = vunpack.c.l.bf16 %v1385
        %v1400 = vunpack.c.l.bf16 %v1388
        %v1401 = vunpack.c.l.bf16 %v1391
        %v1402 = vunpack.c.l.bf16 %v1394
        %v1403 = vsel %vm819, %v1395, 0.0
        %v1404 = vrot.slane %v1403, 4
        %v1405 = vadd.f32 %v1403, %v1404
        %v1406 = vrot.slane %v1405, 2
        %v1407 = vadd.f32 %v1405, %v1406
        %v1408 = vrot.slane %v1407, 1
        %v1409 = vadd.f32 %v1407, %v1408
        %v1410 = vsel %vm819, %v1396, 0.0
        %v1411 = vrot.slane %v1410, 4
        %v1412 = vadd.f32 %v1410, %v1411
        %v1413 = vrot.slane %v1412, 2
        %v1414 = vadd.f32 %v1412, %v1413
        %v1415 = vrot.slane %v1414, 1
        %v1416 = vadd.f32 %v1414, %v1415
        %v1417 = vsel %vm819, %v1397, 0.0
        %v1418 = vrot.slane %v1417, 4
        %v1419 = vadd.f32 %v1417, %v1418
        %v1420 = vrot.slane %v1419, 2
        %v1421 = vadd.f32 %v1419, %v1420
        %v1422 = vrot.slane %v1421, 1
        %v1423 = vadd.f32 %v1421, %v1422
        %v1424 = vsel %vm819, %v1398, 0.0
        %v1425 = vrot.slane %v1424, 4
        %v1426 = vadd.f32 %v1424, %v1425
        %v1427 = vrot.slane %v1426, 2
        %v1428 = vadd.f32 %v1426, %v1427
        %v1429 = vrot.slane %v1428, 1
        %v1430 = vadd.f32 %v1428, %v1429
        %v1431 = vsel %vm819, %v1399, 0.0
        %v1432 = vrot.slane %v1431, 4
        %v1433 = vadd.f32 %v1431, %v1432
        %v1434 = vrot.slane %v1433, 2
        %v1435 = vadd.f32 %v1433, %v1434
        %v1436 = vrot.slane %v1435, 1
        %v1437 = vadd.f32 %v1435, %v1436
        %v1438 = vsel %vm819, %v1400, 0.0
        %v1439 = vrot.slane %v1438, 4
        %v1440 = vadd.f32 %v1438, %v1439
        %v1441 = vrot.slane %v1440, 2
        %v1442 = vadd.f32 %v1440, %v1441
        %v1443 = vrot.slane %v1442, 1
        %v1444 = vadd.f32 %v1442, %v1443
        %v1445 = vsel %vm819, %v1401, 0.0
        %v1446 = vrot.slane %v1445, 4
        %v1447 = vadd.f32 %v1445, %v1446
        %v1448 = vrot.slane %v1447, 2
        %v1449 = vadd.f32 %v1447, %v1448
        %v1450 = vrot.slane %v1449, 1
        %v1451 = vadd.f32 %v1449, %v1450
        %v1452 = vsel %vm819, %v1402, 0.0
        %v1453 = vrot.slane %v1452, 4
        %v1454 = vadd.f32 %v1452, %v1453
        %v1455 = vrot.slane %v1454, 2
        %v1456 = vadd.f32 %v1454, %v1455
        %v1457 = vrot.slane %v1456, 1
        %v1458 = vadd.f32 %v1456, %v1457
        %v1459 = vrcp.pop %v1409
        %v1460 = vrcp.pop %v1416
        %v1461 = vrcp.pop %v1423
        %v1462 = vrcp.pop %v1430
        %v1463 = vrcp.pop %v1437
        %v1464 = vrcp.pop %v1444
        %v1465 = vrcp.pop %v1451
        %v1466 = vrcp.pop %v1458
        %v1467 = vpack.c.bf16 %v1459, %v1459
        %v1468 = vpack.c.bf16 %v1460, %v1460
        %v1469 = vpack.c.bf16 %v1461, %v1461
        %v1470 = vpack.c.bf16 %v1462, %v1462
        %v1471 = vpack.c.bf16 %v1463, %v1463
        %v1472 = vpack.c.bf16 %v1464, %v1464
        %v1473 = vpack.c.bf16 %v1465, %v1465
        %v1474 = vpack.c.bf16 %v1466, %v1466
        %v1475 = vmul.bf16 %v1373, %v1467
        %v1476 = vmul.bf16 %v1376, %v1468
        %v1477 = vmul.bf16 %v1379, %v1469
        %v1478 = vmul.bf16 %v1382, %v1470
        %v1479 = vmul.bf16 %v1385, %v1471
        %v1480 = vmul.bf16 %v1388, %v1472
        %v1481 = vmul.bf16 %v1391, %v1473
        %v1482 = vmul.bf16 %v1394, %v1474
        %v1487 = vunpack.c.l.b16 %v798
        %v1488 = vunpack.c.h.b16 %v798
        %v1489 = vunpack.c.l.b16 %v799
        %v1490 = vunpack.c.h.b16 %v799
        %v1491 = vunpack.c.l.b16 %v800
        %v1492 = vunpack.c.h.b16 %v800
        %v1493 = vunpack.c.l.b16 %v801
        %v1494 = vunpack.c.h.b16 %v801
        %v1495 = vpack.c.b16 %v1487, %v1487
        %v1496 = vpack.c.b16 %v1488, %v1488
        %v1497 = vpack.c.b16 %v1489, %v1489
        %v1498 = vpack.c.b16 %v1490, %v1490
        %v1499 = vpack.c.b16 %v1491, %v1491
        %v1500 = vpack.c.b16 %v1492, %v1492
        %v1501 = vpack.c.b16 %v1493, %v1493
        %v1502 = vpack.c.b16 %v1494, %v1494
        %v1511 = vmul.bf16 %v1475, %v1495
        %v1512 = vmul.bf16 %v1476, %v1496
        %v1513 = vmul.bf16 %v1477, %v1497
        %v1514 = vmul.bf16 %v1478, %v1498
        %v1515 = vmul.bf16 %v1479, %v1499
        %v1516 = vmul.bf16 %v1480, %v1500
        %v1517 = vmul.bf16 %v1481, %v1501
        %v1518 = vmul.bf16 %v1482, %v1502
        %v1519 = vunpack.c.l.bf16 %v1511
        %v1520 = vunpack.c.l.bf16 %v1512
        %v1521 = vunpack.c.l.bf16 %v1513
        %v1522 = vunpack.c.l.bf16 %v1514
        %v1523 = vunpack.c.l.bf16 %v1515
        %v1524 = vunpack.c.l.bf16 %v1516
        %v1525 = vunpack.c.l.bf16 %v1517
        %v1526 = vunpack.c.l.bf16 %v1518
        %v1527 = vsel %vm819, %v1519, 0.0
        %v1528 = vrot.slane %v1527, 4
        %v1529 = vadd.f32 %v1527, %v1528
        %v1530 = vrot.slane %v1529, 2
        %v1531 = vadd.f32 %v1529, %v1530
        %v1532 = vrot.slane %v1531, 1
        %v1533 = vadd.f32 %v1531, %v1532
        %v1534 = vsel %vm819, %v1520, 0.0
        %v1535 = vrot.slane %v1534, 4
        %v1536 = vadd.f32 %v1534, %v1535
        %v1537 = vrot.slane %v1536, 2
        %v1538 = vadd.f32 %v1536, %v1537
        %v1539 = vrot.slane %v1538, 1
        %v1540 = vadd.f32 %v1538, %v1539
        %v1541 = vsel %vm819, %v1521, 0.0
        %v1542 = vrot.slane %v1541, 4
        %v1543 = vadd.f32 %v1541, %v1542
        %v1544 = vrot.slane %v1543, 2
        %v1545 = vadd.f32 %v1543, %v1544
        %v1546 = vrot.slane %v1545, 1
        %v1547 = vadd.f32 %v1545, %v1546
        %v1548 = vsel %vm819, %v1522, 0.0
        %v1549 = vrot.slane %v1548, 4
        %v1550 = vadd.f32 %v1548, %v1549
        %v1551 = vrot.slane %v1550, 2
        %v1552 = vadd.f32 %v1550, %v1551
        %v1553 = vrot.slane %v1552, 1
        %v1554 = vadd.f32 %v1552, %v1553
        %v1555 = vsel %vm819, %v1523, 0.0
        %v1556 = vrot.slane %v1555, 4
        %v1557 = vadd.f32 %v1555, %v1556
        %v1558 = vrot.slane %v1557, 2
        %v1559 = vadd.f32 %v1557, %v1558
        %v1560 = vrot.slane %v1559, 1
        %v1561 = vadd.f32 %v1559, %v1560
        %v1562 = vsel %vm819, %v1524, 0.0
        %v1563 = vrot.slane %v1562, 4
        %v1564 = vadd.f32 %v1562, %v1563
        %v1565 = vrot.slane %v1564, 2
        %v1566 = vadd.f32 %v1564, %v1565
        %v1567 = vrot.slane %v1566, 1
        %v1568 = vadd.f32 %v1566, %v1567
        %v1569 = vsel %vm819, %v1525, 0.0
        %v1570 = vrot.slane %v1569, 4
        %v1571 = vadd.f32 %v1569, %v1570
        %v1572 = vrot.slane %v1571, 2
        %v1573 = vadd.f32 %v1571, %v1572
        %v1574 = vrot.slane %v1573, 1
        %v1575 = vadd.f32 %v1573, %v1574
        %v1576 = vsel %vm819, %v1526, 0.0
        %v1577 = vrot.slane %v1576, 4
        %v1578 = vadd.f32 %v1576, %v1577
        %v1579 = vrot.slane %v1578, 2
        %v1580 = vadd.f32 %v1578, %v1579
        %v1581 = vrot.slane %v1580, 1
        %v1582 = vadd.f32 %v1580, %v1581
        %vm1591 = vcmask 1041409
        %v1592 = vsel %vm1591, %v1540, %v1533
        %vm1593 = vcmask 1042434
        %v1594 = vsel %vm1593, %v1547, %v1592
        %vm1595 = vcmask 1043459
        %v1596 = vsel %vm1595, %v1554, %v1594
        %vm1597 = vcmask 1044484
        %v1598 = vsel %vm1597, %v1561, %v1596
        %vm1599 = vcmask 1045509
        %v1600 = vsel %vm1599, %v1568, %v1598
        %vm1601 = vcmask 1046534
        %v1602 = vsel %vm1601, %v1575, %v1600
        %vm1603 = vcmask 1047559
        %v1604 = vsel %vm1603, %v1582, %v1602
        %1606 = vst.msk [vmem:[%s463] sm:$0xff] %vm819, %v1604
        %s1607 = sand.u32 %s235, 1
        %s1608 = scalar_lea.sflag [#allocation4], %s1607
        %s1609 = sand.u32 %s235, 1
        %s1610 = smul.addr %s1609, 8
        %s1611 = scalar_lea.vmem [#allocation16], %s1610
        // Predicated region
        $region85: #{graph_attention_conv_layer.1} parent=51 // pred_check
          %p1612 = pneg %p245
        $region86: #{graph_attention_conv_layer.1} parent=51 // pred_check_branch
          %1614 = sbr.rel (%p1612) target = $region88
        $region87: #{graph_attention_conv_layer.1} parent=51 // pred_region
          %s1616 = ssub.s32 128, 128
          %1617 = vsyncadd %s1608, %s1616
          %s1618 = smul.addr %s35, 2
          %s1619 = sadd.s32 %s36, %s1618
          %s1620 = smul.addr %s1619, 128
          %s1621 = scalar_lea.hbm %s8, %s1620
          %s1623 = sshll.u32 %s1611, 4
          %s1624 = int_to_ptr.vmem [resolvable:$true] %s1623
          %1626 = dma.vmem_to_hbm [thread:$0]  %s1624, 128, %s1621, %s1608
        $region88: #{graph_attention_conv_layer.1} parent=51 // pred_fallthru
          _
      $region52: #{graph_attention_conv_layer.1} parent=5 // pred_fallthru
        _
      %p1627 = scmp.le.s32.totalorder 2, %s26
      // Predicated region
      $region89: #{graph_attention_conv_layer.1} parent=5 // pred_check
        %p1628 = pneg %p1627
      $region90: #{graph_attention_conv_layer.1} parent=5 // pred_check_branch
        %1630 = sbr.rel (%p1628) target = $region92
      $region91: #{graph_attention_conv_layer.1} parent=5 // pred_region
        %s1631 = ssub.s32 %s26, 2
        // Predicated region
        $region93: #{graph_attention_conv_layer.1} parent=91 // pred_check
          %p1632 = pneg %p251
        $region94: #{graph_attention_conv_layer.1} parent=91 // pred_check_branch
          %1634 = sbr.rel (%p1632) target = $region96
        $region95: #{graph_attention_conv_layer.1} parent=91 // pred_region
          %s1635 = sand.u32 %s236, 1
          %s1636 = scalar_lea.sflag [#allocation4], %s1635
          %s1637 = sand.u32 %s236, 1
          %s1638 = smul.addr %s1637, 8
          %s1639 = scalar_lea.vmem [#allocation16], %s1638
          %1640 = dma.done %s1636, 128
        $region96: #{graph_attention_conv_layer.1} parent=91 // pred_fallthru
          _
      $region92: #{graph_attention_conv_layer.1} parent=5 // pred_fallthru
        _
    $region6: #{graph_attention_conv_layer.1} parent=1 // loop_footer
      %s30 = sadd.s32 1, %s26
    $region7: #{graph_attention_conv_layer.1} parent=1 // loop_footer_branch
      %25 = sbr.rel target = $region3
    $region8: #{graph_attention_conv_layer.1} parent=1 // loop_exit
      _
    %1641 = vsyncpa [#allocation3], 1
    %s1642 = scalar_lea.sflag [#allocation3], 1
    %1643 = vsyncpa %s1642, 1
    %1644 = vsyncpa [#allocation6], 1
    %s1645 = scalar_lea.sflag [#allocation6], 1
    %1646 = vsyncpa %s1645, 1
    %1647 = vsyncpa [#allocation9], 1
    %1648 = vsyncpa [#allocation12], 1
    %1649 = vsyncpa [#allocation15], 1
    %1650 = vsyncpa [#allocation4], 1
    %s1651 = scalar_lea.sflag [#allocation4], 1
    %1652 = vsyncpa %s1651, 1

</llo_original>
